<compile_context>
chip_gen: v6e
topology: v6e:2x2x1
jax: 0.10.0
libtpu: 0.0.40
codegen_flags: <defaults>
</compile_context>

<pallas_src>
import functools

import jax
import jax.numpy as jnp
from jax.experimental import pallas as pl
from jax.experimental.pallas import tpu as pltpu

LN_EPS = 1e-5  # PyTorch nn.LayerNorm default


def _layernorm(h, gamma, beta):
    # PyTorch LayerNorm: biased variance over the last dim (f32 math).
    mean = jnp.mean(h, axis=-1, keepdims=True)
    var = jnp.mean(jnp.square(h - mean), axis=-1, keepdims=True)
    inv = jax.lax.rsqrt(var + LN_EPS)
    return (h - mean) * inv * gamma + beta


def mlp_kernel(x_ref,
               w1_ref, b1_ref, g1_ref, be1_ref,
               w2_ref, b2_ref, g2_ref, be2_ref,
               wh_ref, bh_ref,
               o_ref,
               *, output_size):
    # x and the weights arrive in bf16 (MXU operands); all accumulation and
    # elementwise math is f32.
    x = x_ref[...]

    # Layer 1: Linear -> LayerNorm -> ReLU
    h = jnp.dot(x, w1_ref[...], preferred_element_type=jnp.float32) + b1_ref[...]
    h = _layernorm(h, g1_ref[...], be1_ref[...])
    h = jnp.maximum(h, 0.0)

    # Layer 2: Linear -> LayerNorm -> ReLU
    h = jnp.dot(h.astype(jnp.bfloat16), w2_ref[...],
                preferred_element_type=jnp.float32) + b2_ref[...]
    h = _layernorm(h, g2_ref[...], be2_ref[...])
    h = jnp.maximum(h, 0.0)

    # Fused head: [final_output | sigmoid_output] in a single MXU pass.
    head = jnp.dot(h.astype(jnp.bfloat16), wh_ref[...],
                   preferred_element_type=jnp.float32) + bh_ref[...]

    # Apply sigmoid only to the last column, single full-block store.
    col = jax.lax.broadcasted_iota(jnp.int32, head.shape, 1)
    head = jnp.where(col == output_size, jax.nn.sigmoid(head), head)
    o_ref[...] = head


def network_forward(x, params, *, output_size, block_b=256):
    """x: [B, input_size] float32.  Returns [B, output_size + 1] float32."""
    B, in_size = x.shape
    hidden = params["w1"].shape[1]
    out_width = output_size + 1

    # bf16 activations pack 16 rows per sublane group.
    block_b = max(16, (block_b + 15) // 16 * 16)

    # ---- host-side packing / padding (cheap, once per call) ----
    # Pad feature dim to a multiple of 128 lanes; pad batch to a tile multiple.
    in_pad = (in_size + 127) // 128 * 128
    b_pad = (B + block_b - 1) // block_b * block_b

    xp = jnp.zeros((b_pad, in_pad), jnp.bfloat16)
    xp = xp.at[:B, :in_size].set(x.astype(jnp.bfloat16))

    w1 = jnp.zeros((in_pad, hidden), jnp.bfloat16)
    w1 = w1.at[:in_size, :].set(params["w1"].astype(jnp.bfloat16))
    w2 = params["w2"].astype(jnp.bfloat16)
    # Fuse output + sigmoid heads: [hidden, output_size + 1].
    wh = jnp.concatenate([params["wo"], params["ws"]], axis=1).astype(jnp.bfloat16)
    bh = jnp.concatenate([params["bo"], params["bs"]], axis=1)

    weight_args = (
        w1, params["b1"], params["g1"], params["be1"],
        w2, params["b2"], params["g2"], params["be2"],
        wh, bh,
    )

    # Full-array blocks for every parameter: constant index_map -> the tiles
    # stay resident in VMEM across the whole batch grid (no re-DMA).
    def full_spec(a):
        return pl.BlockSpec(a.shape, lambda i: (0,) * a.ndim)

    grid = (b_pad // block_b,)
    kernel = functools.partial(mlp_kernel, output_size=output_size)

    out = pl.pallas_call(
        kernel,
        out_shape=jax.ShapeDtypeStruct((b_pad, out_width), jnp.float32),
        grid_spec=pltpu.PrefetchScalarGridSpec(
            num_scalar_prefetch=0,
            grid=grid,
            in_specs=[pl.BlockSpec((block_b, in_pad), lambda i: (i, 0))]
                     + [full_spec(a) for a in weight_args],
            out_specs=pl.BlockSpec((block_b, out_width), lambda i: (i, 0)),
        ),
        compiler_params=pltpu.CompilerParams(
            dimension_semantics=("parallel",)),
    )(xp, *weight_args)

    return out[:B]


def init_params(key, input_size, hidden_sizes, output_size):
    """Deterministic init mimicking PyTorch defaults (uniform ±1/sqrt(fan_in))."""
    h0, h1 = hidden_sizes
    keys = jax.random.split(key, 8)

    def linear(kw, kb, fan_in, fan_out):
        bound = 1.0 / jnp.sqrt(fan_in)
        w = jax.random.uniform(kw, (fan_in, fan_out), jnp.float32, -bound, bound)
        b = jax.random.uniform(kb, (1, fan_out), jnp.float32, -bound, bound)
        return w, b

    w1, b1 = linear(keys[0], keys[1], input_size, h0)
    w2, b2 = linear(keys[2], keys[3], h0, h1)
    wo, bo = linear(keys[4], keys[5], h1, output_size)
    ws, bs = linear(keys[6], keys[7], h1, 1)

    return dict(
        w1=w1, b1=b1,
        g1=jnp.ones((1, h0), jnp.float32), be1=jnp.zeros((1, h0), jnp.float32),
        w2=w2, b2=b2,
        g2=jnp.ones((1, h1), jnp.float32), be2=jnp.zeros((1, h1), jnp.float32),
        wo=wo, bo=bo,
        ws=ws, bs=bs,
    )


def reference_forward_f32(x, params):
    """Pure-JAX f32 reference (matches the PyTorch module semantics)."""
    h = x @ params["w1"] + params["b1"]
    h = _layernorm(h, params["g1"], params["be1"])
    h = jnp.maximum(h, 0.0)
    h = h @ params["w2"] + params["b2"]
    h = _layernorm(h, params["g2"], params["be2"])
    h = jnp.maximum(h, 0.0)
    final = h @ params["wo"] + params["bo"]
    sig = jax.nn.sigmoid(h @ params["ws"] + params["bs"])
    return jnp.concatenate([final, sig], axis=-1)


def reference_forward_bf16(x, params):
    """Pure-JAX reference with the same bf16 matmul inputs as the kernel."""
    bf = jnp.bfloat16
    h = jnp.dot(x.astype(bf), params["w1"].astype(bf),
                preferred_element_type=jnp.float32) + params["b1"]
    h = _layernorm(h, params["g1"], params["be1"])
    h = jnp.maximum(h, 0.0)
    h = jnp.dot(h.astype(bf), params["w2"].astype(bf),
                preferred_element_type=jnp.float32) + params["b2"]
    h = _layernorm(h, params["g2"], params["be2"])
    h = jnp.maximum(h, 0.0)
    wh = jnp.concatenate([params["wo"], params["ws"]], axis=1).astype(bf)
    bh = jnp.concatenate([params["bo"], params["bs"]], axis=1)
    head = jnp.dot(h.astype(bf), wh, preferred_element_type=jnp.float32) + bh
    final = head[:, :-1]
    sig = jax.nn.sigmoid(head[:, -1:])
    return jnp.concatenate([final, sig], axis=-1)


if __name__ == "__main__":
    INPUT_SIZE = 32
    OUTPUT_SIZE = 7
    HIDDEN_SIZES = [256, 256]
    BATCH = 200      # deliberately NOT a multiple of the tile -> exercises padding
    BLOCK_B = 128    # 2 grid steps after padding (keeps both v7x TCs busy)

    key = jax.random.PRNGKey(0)
    kx, kp = jax.random.split(key)
    x = jax.random.normal(kx, (BATCH, INPUT_SIZE), jnp.float32)
    params = init_params(kp, INPUT_SIZE, HIDDEN_SIZES, OUTPUT_SIZE)

    out = network_forward(x, params, output_size=OUTPUT_SIZE, block_b=BLOCK_B)
    out = jax.block_until_ready(out)

    assert out.shape == (BATCH, OUTPUT_SIZE + 1)

    # Tight check vs. a reference using the same bf16 MXU operands.
    ref_bf16 = reference_forward_bf16(x, params)
    assert jnp.allclose(out, ref_bf16, atol=2e-3, rtol=2e-3)

    # Loose check vs. the full-f32 (PyTorch-semantics) reference.
    ref_f32 = reference_forward_f32(x, params)
    assert jnp.allclose(out, ref_f32, atol=5e-2, rtol=5e-2)

    print("KERNEL_OK")
</pallas_src>

<mosaic_0001>
module attributes {stable_mosaic.version = 11 : i64} {
  func.func @mlp_kernel(%arg0: i32, %arg1: memref<128x128xbf16, #tpu.memory_space<vmem>>, %arg2: memref<128x256xbf16, #tpu.memory_space<vmem>>, %arg3: memref<1x256xf32, #tpu.memory_space<vmem>>, %arg4: memref<1x256xf32, #tpu.memory_space<vmem>>, %arg5: memref<1x256xf32, #tpu.memory_space<vmem>>, %arg6: memref<256x256xbf16, #tpu.memory_space<vmem>>, %arg7: memref<1x256xf32, #tpu.memory_space<vmem>>, %arg8: memref<1x256xf32, #tpu.memory_space<vmem>>, %arg9: memref<1x256xf32, #tpu.memory_space<vmem>>, %arg10: memref<256x8xbf16, #tpu.memory_space<vmem>>, %arg11: memref<1x8xf32, #tpu.memory_space<vmem>>, %arg12: memref<128x8xf32, #tpu.memory_space<vmem>>) attributes {dimension_semantics = [#tpu.dimension_semantics<parallel>], iteration_bounds = array<i64: 2>, scalar_prefetch = 0 : i64, scratch_operands = 0 : i64, tpu.core_type = #tpu.core_type<tc>, window_params = [{transform_indices = @transform_0, window_bounds = array<i64: 128, 128>}, {pipeline_mode = #tpu.pipeline_mode<synchronous>, transform_indices = @transform_1, window_bounds = array<i64: 128, 256>}, {pipeline_mode = #tpu.pipeline_mode<synchronous>, transform_indices = @transform_2, window_bounds = array<i64: 1, 256>}, {pipeline_mode = #tpu.pipeline_mode<synchronous>, transform_indices = @transform_3, window_bounds = array<i64: 1, 256>}, {pipeline_mode = #tpu.pipeline_mode<synchronous>, transform_indices = @transform_4, window_bounds = array<i64: 1, 256>}, {pipeline_mode = #tpu.pipeline_mode<synchronous>, transform_indices = @transform_5, window_bounds = array<i64: 256, 256>}, {pipeline_mode = #tpu.pipeline_mode<synchronous>, transform_indices = @transform_6, window_bounds = array<i64: 1, 256>}, {pipeline_mode = #tpu.pipeline_mode<synchronous>, transform_indices = @transform_7, window_bounds = array<i64: 1, 256>}, {pipeline_mode = #tpu.pipeline_mode<synchronous>, transform_indices = @transform_8, window_bounds = array<i64: 1, 256>}, {pipeline_mode = #tpu.pipeline_mode<synchronous>, transform_indices = @transform_9, window_bounds = array<i64: 256, 8>}, {pipeline_mode = #tpu.pipeline_mode<synchronous>, transform_indices = @transform_10, window_bounds = array<i64: 1, 8>}, {transform_indices = @transform_11, window_bounds = array<i64: 128, 8>}]} {
    %c0 = arith.constant 0 : index
    %c0_0 = arith.constant 0 : index
    %0 = vector.load %arg1[%c0, %c0_0] : memref<128x128xbf16, #tpu.memory_space<vmem>>, vector<128x128xbf16>
    %c0_1 = arith.constant 0 : index
    %c0_2 = arith.constant 0 : index
    %1 = vector.load %arg2[%c0_1, %c0_2] : memref<128x256xbf16, #tpu.memory_space<vmem>>, vector<128x256xbf16>
    %cst = arith.constant dense<0.000000e+00> : vector<128x256xf32>
    %2 = tpu.matmul %0, %1, %cst {dimension_numbers = #tpu.dot_dimension_numbers<[1], [0], [0], [1], [0, 0, 1, 1], [], []>} : vector<128x128xbf16>, vector<128x256xbf16>, vector<128x256xf32> -> vector<128x256xf32>
    %c0_3 = arith.constant 0 : index
    %c0_4 = arith.constant 0 : index
    %3 = vector.load %arg3[%c0_3, %c0_4] : memref<1x256xf32, #tpu.memory_space<vmem>>, vector<1x256xf32>
    %4 = vector.broadcast %3 : vector<1x256xf32> to vector<128x256xf32>
    %5 = arith.addf %2, %4 : vector<128x256xf32>
    %c0_5 = arith.constant 0 : index
    %c0_6 = arith.constant 0 : index
    %6 = vector.load %arg4[%c0_5, %c0_6] : memref<1x256xf32, #tpu.memory_space<vmem>>, vector<1x256xf32>
    %c0_7 = arith.constant 0 : index
    %c0_8 = arith.constant 0 : index
    %7 = vector.load %arg5[%c0_7, %c0_8] : memref<1x256xf32, #tpu.memory_space<vmem>>, vector<1x256xf32>
    %cst_9 = arith.constant dense<0.000000e+00> : vector<128xf32>
    %8 = vector.multi_reduction <add>, %5, %cst_9 [1] : vector<128x256xf32> to vector<128xf32>
    %9 = vector.shape_cast %8 : vector<128xf32> to vector<128x1xf32>
    %cst_10 = arith.constant 2.560000e+02 : f32
    %10 = vector.broadcast %cst_10 : f32 to vector<128x1xf32>
    %11 = arith.divf %9, %10 : vector<128x1xf32>
    %12 = vector.broadcast %11 : vector<128x1xf32> to vector<128x256xf32>
    %13 = arith.subf %5, %12 : vector<128x256xf32>
    %14 = arith.mulf %13, %13 : vector<128x256xf32>
    %cst_11 = arith.constant dense<0.000000e+00> : vector<128xf32>
    %15 = vector.multi_reduction <add>, %14, %cst_11 [1] : vector<128x256xf32> to vector<128xf32>
    %16 = vector.shape_cast %15 : vector<128xf32> to vector<128x1xf32>
    %cst_12 = arith.constant 2.560000e+02 : f32
    %17 = vector.broadcast %cst_12 : f32 to vector<128x1xf32>
    %18 = arith.divf %16, %17 : vector<128x1xf32>
    %cst_13 = arith.constant 9.99999974E-6 : f32
    %19 = vector.broadcast %cst_13 : f32 to vector<128x1xf32>
    %20 = arith.addf %18, %19 : vector<128x1xf32>
    %21 = math.rsqrt %20 : vector<128x1xf32>
    %22 = vector.broadcast %11 : vector<128x1xf32> to vector<128x256xf32>
    %23 = arith.subf %5, %22 : vector<128x256xf32>
    %24 = vector.broadcast %21 : vector<128x1xf32> to vector<128x256xf32>
    %25 = arith.mulf %23, %24 : vector<128x256xf32>
    %26 = vector.broadcast %6 : vector<1x256xf32> to vector<128x256xf32>
    %27 = arith.mulf %25, %26 : vector<128x256xf32>
    %28 = vector.broadcast %7 : vector<1x256xf32> to vector<128x256xf32>
    %29 = arith.addf %27, %28 : vector<128x256xf32>
    %cst_14 = arith.constant 0.000000e+00 : f32
    %30 = vector.broadcast %cst_14 : f32 to vector<128x256xf32>
    %31 = arith.maximumf %29, %30 : vector<128x256xf32>
    %32 = arith.truncf %31 : vector<128x256xf32> to vector<128x256xbf16>
    %c0_15 = arith.constant 0 : index
    %c0_16 = arith.constant 0 : index
    %33 = vector.load %arg6[%c0_15, %c0_16] : memref<256x256xbf16, #tpu.memory_space<vmem>>, vector<256x256xbf16>
    %cst_17 = arith.constant dense<0.000000e+00> : vector<128x256xf32>
    %34 = tpu.matmul %32, %33, %cst_17 {dimension_numbers = #tpu.dot_dimension_numbers<[1], [0], [0], [1], [0, 0, 1, 1], [], []>} : vector<128x256xbf16>, vector<256x256xbf16>, vector<128x256xf32> -> vector<128x256xf32>
    %c0_18 = arith.constant 0 : index
    %c0_19 = arith.constant 0 : index
    %35 = vector.load %arg7[%c0_18, %c0_19] : memref<1x256xf32, #tpu.memory_space<vmem>>, vector<1x256xf32>
    %36 = vector.broadcast %35 : vector<1x256xf32> to vector<128x256xf32>
    %37 = arith.addf %34, %36 : vector<128x256xf32>
    %c0_20 = arith.constant 0 : index
    %c0_21 = arith.constant 0 : index
    %38 = vector.load %arg8[%c0_20, %c0_21] : memref<1x256xf32, #tpu.memory_space<vmem>>, vector<1x256xf32>
    %c0_22 = arith.constant 0 : index
    %c0_23 = arith.constant 0 : index
    %39 = vector.load %arg9[%c0_22, %c0_23] : memref<1x256xf32, #tpu.memory_space<vmem>>, vector<1x256xf32>
    %cst_24 = arith.constant dense<0.000000e+00> : vector<128xf32>
    %40 = vector.multi_reduction <add>, %37, %cst_24 [1] : vector<128x256xf32> to vector<128xf32>
    %41 = vector.shape_cast %40 : vector<128xf32> to vector<128x1xf32>
    %cst_25 = arith.constant 2.560000e+02 : f32
    %42 = vector.broadcast %cst_25 : f32 to vector<128x1xf32>
    %43 = arith.divf %41, %42 : vector<128x1xf32>
    %44 = vector.broadcast %43 : vector<128x1xf32> to vector<128x256xf32>
    %45 = arith.subf %37, %44 : vector<128x256xf32>
    %46 = arith.mulf %45, %45 : vector<128x256xf32>
    %cst_26 = arith.constant dense<0.000000e+00> : vector<128xf32>
    %47 = vector.multi_reduction <add>, %46, %cst_26 [1] : vector<128x256xf32> to vector<128xf32>
    %48 = vector.shape_cast %47 : vector<128xf32> to vector<128x1xf32>
    %cst_27 = arith.constant 2.560000e+02 : f32
    %49 = vector.broadcast %cst_27 : f32 to vector<128x1xf32>
    %50 = arith.divf %48, %49 : vector<128x1xf32>
    %cst_28 = arith.constant 9.99999974E-6 : f32
    %51 = vector.broadcast %cst_28 : f32 to vector<128x1xf32>
    %52 = arith.addf %50, %51 : vector<128x1xf32>
    %53 = math.rsqrt %52 : vector<128x1xf32>
    %54 = vector.broadcast %43 : vector<128x1xf32> to vector<128x256xf32>
    %55 = arith.subf %37, %54 : vector<128x256xf32>
    %56 = vector.broadcast %53 : vector<128x1xf32> to vector<128x256xf32>
    %57 = arith.mulf %55, %56 : vector<128x256xf32>
    %58 = vector.broadcast %38 : vector<1x256xf32> to vector<128x256xf32>
    %59 = arith.mulf %57, %58 : vector<128x256xf32>
    %60 = vector.broadcast %39 : vector<1x256xf32> to vector<128x256xf32>
    %61 = arith.addf %59, %60 : vector<128x256xf32>
    %cst_29 = arith.constant 0.000000e+00 : f32
    %62 = vector.broadcast %cst_29 : f32 to vector<128x256xf32>
    %63 = arith.maximumf %61, %62 : vector<128x256xf32>
    %64 = arith.truncf %63 : vector<128x256xf32> to vector<128x256xbf16>
    %c0_30 = arith.constant 0 : index
    %c0_31 = arith.constant 0 : index
    %65 = vector.load %arg10[%c0_30, %c0_31] : memref<256x8xbf16, #tpu.memory_space<vmem>>, vector<256x8xbf16>
    %cst_32 = arith.constant dense<0.000000e+00> : vector<128x8xf32>
    %66 = tpu.matmul %64, %65, %cst_32 {dimension_numbers = #tpu.dot_dimension_numbers<[1], [0], [0], [1], [0, 0, 1, 1], [], []>} : vector<128x256xbf16>, vector<256x8xbf16>, vector<128x8xf32> -> vector<128x8xf32>
    %c0_33 = arith.constant 0 : index
    %c0_34 = arith.constant 0 : index
    %67 = vector.load %arg11[%c0_33, %c0_34] : memref<1x8xf32, #tpu.memory_space<vmem>>, vector<1x8xf32>
    %68 = vector.broadcast %67 : vector<1x8xf32> to vector<128x8xf32>
    %69 = arith.addf %66, %68 : vector<128x8xf32>
    %70 = tpu.iota {dimensions = array<i32: 1>} : vector<128x8xi32>
    %c7_i32 = arith.constant 7 : i32
    %71 = vector.broadcast %c7_i32 : i32 to vector<128x8xi32>
    %72 = arith.cmpi eq, %70, %71 : vector<128x8xi32>
    %73 = arith.negf %69 : vector<128x8xf32>
    %74 = math.exp %73 : vector<128x8xf32>
    %cst_35 = arith.constant 1.000000e+00 : f32
    %75 = vector.broadcast %cst_35 : f32 to vector<128x8xf32>
    %76 = arith.addf %75, %74 : vector<128x8xf32>
    %77 = arith.divf %75, %76 : vector<128x8xf32>
    %78 = arith.select %72, %77, %69 : vector<128x8xi1>, vector<128x8xf32>
    %c0_36 = arith.constant 0 : index
    %c0_37 = arith.constant 0 : index
    %79 = vector.load %arg12[%c0_36, %c0_37] : memref<128x8xf32, #tpu.memory_space<vmem>>, vector<128x8xf32>
    tpu.vector_store %arg12[%c0_36, %c0_37], %78 {strides = array<i32>} : memref<128x8xf32, #tpu.memory_space<vmem>>, vector<128x8xf32>,
    return
  }
  func.func @transform_0(%arg0: i32) -> (i32, i32) {
    %c0_i32 = arith.constant 0 : i32
    %c0_i32_0 = arith.constant 0 : i32
    return %arg0, %c0_i32 : i32, i32
  }
  func.func @transform_1(%arg0: i32) -> (i32, i32) {
    %c0_i32 = arith.constant 0 : i32
    %c0_i32_0 = arith.constant 0 : i32
    %c0_i32_1 = arith.constant 0 : i32
    return %c0_i32, %c0_i32_0 : i32, i32
  }
  func.func @transform_2(%arg0: i32) -> (i32, i32) {
    %c0_i32 = arith.constant 0 : i32
    %c0_i32_0 = arith.constant 0 : i32
    %c0_i32_1 = arith.constant 0 : i32
    return %c0_i32, %c0_i32_0 : i32, i32
  }
  func.func @transform_3(%arg0: i32) -> (i32, i32) {
    %c0_i32 = arith.constant 0 : i32
    %c0_i32_0 = arith.constant 0 : i32
    %c0_i32_1 = arith.constant 0 : i32
    return %c0_i32, %c0_i32_0 : i32, i32
  }
  func.func @transform_4(%arg0: i32) -> (i32, i32) {
    %c0_i32 = arith.constant 0 : i32
    %c0_i32_0 = arith.constant 0 : i32
    %c0_i32_1 = arith.constant 0 : i32
    return %c0_i32, %c0_i32_0 : i32, i32
  }
  func.func @transform_5(%arg0: i32) -> (i32, i32) {
    %c0_i32 = arith.constant 0 : i32
    %c0_i32_0 = arith.constant 0 : i32
    %c0_i32_1 = arith.constant 0 : i32
    return %c0_i32, %c0_i32_0 : i32, i32
  }
  func.func @transform_6(%arg0: i32) -> (i32, i32) {
    %c0_i32 = arith.constant 0 : i32
    %c0_i32_0 = arith.constant 0 : i32
    %c0_i32_1 = arith.constant 0 : i32
    return %c0_i32, %c0_i32_0 : i32, i32
  }
  func.func @transform_7(%arg0: i32) -> (i32, i32) {
    %c0_i32 = arith.constant 0 : i32
    %c0_i32_0 = arith.constant 0 : i32
    %c0_i32_1 = arith.constant 0 : i32
    return %c0_i32, %c0_i32_0 : i32, i32
  }
  func.func @transform_8(%arg0: i32) -> (i32, i32) {
    %c0_i32 = arith.constant 0 : i32
    %c0_i32_0 = arith.constant 0 : i32
    %c0_i32_1 = arith.constant 0 : i32
    return %c0_i32, %c0_i32_0 : i32, i32
  }
  func.func @transform_9(%arg0: i32) -> (i32, i32) {
    %c0_i32 = arith.constant 0 : i32
    %c0_i32_0 = arith.constant 0 : i32
    %c0_i32_1 = arith.constant 0 : i32
    return %c0_i32, %c0_i32_0 : i32, i32
  }
  func.func @transform_10(%arg0: i32) -> (i32, i32) {
    %c0_i32 = arith.constant 0 : i32
    %c0_i32_0 = arith.constant 0 : i32
    %c0_i32_1 = arith.constant 0 : i32
    return %c0_i32, %c0_i32_0 : i32, i32
  }
  func.func @transform_11(%arg0: i32) -> (i32, i32) {
    %c0_i32 = arith.constant 0 : i32
    %c0_i32_0 = arith.constant 0 : i32
    return %arg0, %c0_i32 : i32, i32
  }
}

</mosaic_0001>

<llo_original>
// kernel: tpu_custom_call.1
$region0: #{tpu_custom_call.1}
  #allocation0 [shape = 'u32[]', space=smem, size = 0x4, offset = 0x4, fixed_abs, tag = 'smem constant byte address 0x4 - core index']
  #allocation1 [shape = 'u32[144,128]{1,0:T(1,128)}', space=vmem, size = 0x12000, scoped, tag = 'internal scratch']
  %s0 = inlined_call_operand.vmem [shape: bf16[256,128], index: 0, kind: input, shape index: {}]
  %s1 = inlined_call_operand.hbm [shape: bf16[128,256], index: 1, kind: input, shape index: {}]
  %s2 = inlined_call_operand.vmem [shape: f32[1,256], index: 2, kind: input, shape index: {}]
  %s3 = inlined_call_operand.vmem [shape: f32[1,256], index: 3, kind: input, shape index: {}]
  %s4 = inlined_call_operand.vmem [shape: f32[1,256], index: 4, kind: input, shape index: {}]
  %s5 = inlined_call_operand.hbm [shape: bf16[256,256], index: 5, kind: input, shape index: {}]
  %s6 = inlined_call_operand.vmem [shape: f32[1,256], index: 6, kind: input, shape index: {}]
  %s7 = inlined_call_operand.vmem [shape: f32[1,256], index: 7, kind: input, shape index: {}]
  %s8 = inlined_call_operand.vmem [shape: f32[1,256], index: 8, kind: input, shape index: {}]
  %s9 = inlined_call_operand.vmem [shape: bf16[256,8], index: 9, kind: input, shape index: {}]
  %s10 = inlined_call_operand.vmem [shape: f32[1,8], index: 10, kind: input, shape index: {}]
  %s11 = inlined_call_operand.vmem [shape: f32[256,8], index: 11, kind: output, shape index: {}]
  %s12 = sld [smem:[#allocation0]]
  $region85: #{tpu_custom_call.1} parent=0
    _
  %s14 = ssub.s32 1, %s12
  %s15 = scalar_select 0, %s14, %s12
  $region1: #{tpu_custom_call.1} parent=0
    #allocation2 [shape = 'u8[65536]{0}', space=vmem, size = 0x10000, scoped, tag = 'input window, operand 1, single buffered']
    #allocation3 [shape = 's32[2]{0}', space=sflag, size = 0x8, scoped, tag = 'scoped memory for tpu_custom_call.1']
    #allocation4 [shape = 'u8[131072]{0}', space=vmem, size = 0x20000, scoped, tag = 'input window, operand 5, single buffered']
    #allocation5 [shape = 's32[1]{0}', space=sflag, size = 0x4, scoped, tag = 'scoped memory for tpu_custom_call.1']
    %16 = vsyncpa [#allocation3], 0
    %17 = vsyncpa [#allocation5], 0
    loop: start=0, step=1, limit=4
    $region2: #{tpu_custom_call.1} parent=1 // loop_pre_header
      _
    $region3: #{tpu_custom_call.1} parent=1 // loop_header
      %s19 = sphi 0, %s23
      %p20 = scmp.ge.s32.totalorder %s19, 4
      %s29 = sphi 0, %s31
      %s32 = sphi 0, %s29
      %s33 = sphi 0, %s32
      %s49 = sphi 0, %s33
      %s53 = sphi 0, %s53
      %s55 = sphi 0, %s53
      %s56 = sphi 0, %s55
      %s70 = sphi 0, %s56
      %s74 = sphi 0, %s74
      %s76 = sphi 0, %s74
      %s77 = sphi 0, %s76
      %s91 = sphi 0, %s77
      %s95 = sphi 0, %s95
      %s97 = sphi 0, %s95
      %s98 = sphi 0, %s97
      %s112 = sphi 0, %s98
      %s116 = sphi 0, %s116
      %s118 = sphi 0, %s116
      %s119 = sphi 0, %s118
      %s133 = sphi 0, %s119
      %s137 = sphi 0, %s137
      %s139 = sphi 0, %s137
      %s140 = sphi 0, %s139
      %s154 = sphi 0, %s140
      %s158 = sphi 0, %s158
      %s160 = sphi 0, %s158
      %s161 = sphi 0, %s160
      %s175 = sphi 0, %s161
      %s179 = sphi 0, %s179
      %s181 = sphi 0, %s179
      %s182 = sphi 0, %s181
      %s196 = sphi 0, %s182
      %s200 = sphi 0, %s200
      %s202 = sphi 0, %s200
      %s203 = sphi 0, %s202
      %s217 = sphi 0, %s203
      %s221 = sphi 0, %s221
      %s223 = sphi 0, %s221
      %s224 = sphi 0, %s223
      %s238 = sphi 0, %s224
      %s242 = sphi 0, %s242
      %s244 = sphi 0, %s242
      %s245 = sphi 0, %s244
      %s259 = sphi 0, %s245
      %s265 = sphi 0, %s267
      %s268 = sphi 0, %s265
      %s269 = sphi 0, %s268
      %s285 = sphi 0, %s269
    $region4: #{tpu_custom_call.1} parent=1 // loop_header_branch
      %22 = sbr.rel (%p20) target = $region8
    $region5: #{tpu_custom_call.1} parent=1 // loop_body
      %s24 = ssub.s32 %s19, 1
      %s25 = ssub.s32 %s19, 2
      %s26 = sadd.s32 %s19, 1
      %s27 = ssub.s32 %s19, %s26
      %p28 = scmp.eq.s32.totalorder %s27, 0
      %s30 = sadd.s32 %s29, 1
      %s31 = scalar_select %p28, %s29, %s30
      %p34 = pneg %p28
      %p35 = scmp.eq.s32.totalorder %s19, 1
      %p36 = por %p34, %p35
      %p37 = scmp.ne.s32.totalorder %s29, %s32
      %p38 = scmp.eq.s32.totalorder %s19, 0
      %p39 = por %p37, %p38
      %p40 = scmp.ne.s32.totalorder %s29, %s32
      %p41 = scmp.eq.s32.totalorder %s24, 1
      %p42 = por %p40, %p41
      %p43 = scmp.ne.s32.totalorder %s32, %s33
      %p44 = scmp.eq.s32.totalorder %s24, 0
      %p45 = por %p43, %p44
      %p46 = scmp.ne.s32.totalorder %s32, %s33
      %p47 = scmp.eq.s32.totalorder %s25, 1
      %p48 = por %p46, %p47
      %p50 = scmp.ne.s32.totalorder %s33, %s49
      %p51 = scmp.eq.s32.totalorder %s25, 0
      %p52 = por %p50, %p51
      %s54 = sadd.s32 %s53, 1
      %p57 = scmp.eq.s32.totalorder %s19, 1
      %p58 = scmp.ne.s32.totalorder %s53, %s55
      %p59 = scmp.eq.s32.totalorder %s19, 0
      %p60 = por %p58, %p59
      %p61 = scmp.ne.s32.totalorder %s53, %s55
      %p62 = scmp.eq.s32.totalorder %s24, 1
      %p63 = por %p61, %p62
      %p64 = scmp.ne.s32.totalorder %s55, %s56
      %p65 = scmp.eq.s32.totalorder %s24, 0
      %p66 = por %p64, %p65
      %p67 = scmp.ne.s32.totalorder %s55, %s56
      %p68 = scmp.eq.s32.totalorder %s25, 1
      %p69 = por %p67, %p68
      %p71 = scmp.ne.s32.totalorder %s56, %s70
      %p72 = scmp.eq.s32.totalorder %s25, 0
      %p73 = por %p71, %p72
      %s75 = sadd.s32 %s74, 1
      %p78 = scmp.eq.s32.totalorder %s19, 1
      %p79 = scmp.ne.s32.totalorder %s74, %s76
      %p80 = scmp.eq.s32.totalorder %s19, 0
      %p81 = por %p79, %p80
      %p82 = scmp.ne.s32.totalorder %s74, %s76
      %p83 = scmp.eq.s32.totalorder %s24, 1
      %p84 = por %p82, %p83
      %p85 = scmp.ne.s32.totalorder %s76, %s77
      %p86 = scmp.eq.s32.totalorder %s24, 0
      %p87 = por %p85, %p86
      %p88 = scmp.ne.s32.totalorder %s76, %s77
      %p89 = scmp.eq.s32.totalorder %s25, 1
      %p90 = por %p88, %p89
      %p92 = scmp.ne.s32.totalorder %s77, %s91
      %p93 = scmp.eq.s32.totalorder %s25, 0
      %p94 = por %p92, %p93
      %s96 = sadd.s32 %s95, 1
      %p99 = scmp.eq.s32.totalorder %s19, 1
      %p100 = scmp.ne.s32.totalorder %s95, %s97
      %p101 = scmp.eq.s32.totalorder %s19, 0
      %p102 = por %p100, %p101
      %p103 = scmp.ne.s32.totalorder %s95, %s97
      %p104 = scmp.eq.s32.totalorder %s24, 1
      %p105 = por %p103, %p104
      %p106 = scmp.ne.s32.totalorder %s97, %s98
      %p107 = scmp.eq.s32.totalorder %s24, 0
      %p108 = por %p106, %p107
      %p109 = scmp.ne.s32.totalorder %s97, %s98
      %p110 = scmp.eq.s32.totalorder %s25, 1
      %p111 = por %p109, %p110
      %p113 = scmp.ne.s32.totalorder %s98, %s112
      %p114 = scmp.eq.s32.totalorder %s25, 0
      %p115 = por %p113, %p114
      %s117 = sadd.s32 %s116, 1
      %p120 = scmp.eq.s32.totalorder %s19, 1
      %p121 = scmp.ne.s32.totalorder %s116, %s118
      %p122 = scmp.eq.s32.totalorder %s19, 0
      %p123 = por %p121, %p122
      %p124 = scmp.ne.s32.totalorder %s116, %s118
      %p125 = scmp.eq.s32.totalorder %s24, 1
      %p126 = por %p124, %p125
      %p127 = scmp.ne.s32.totalorder %s118, %s119
      %p128 = scmp.eq.s32.totalorder %s24, 0
      %p129 = por %p127, %p128
      %p130 = scmp.ne.s32.totalorder %s118, %s119
      %p131 = scmp.eq.s32.totalorder %s25, 1
      %p132 = por %p130, %p131
      %p134 = scmp.ne.s32.totalorder %s119, %s133
      %p135 = scmp.eq.s32.totalorder %s25, 0
      %p136 = por %p134, %p135
      %s138 = sadd.s32 %s137, 1
      %p141 = scmp.eq.s32.totalorder %s19, 1
      %p142 = scmp.ne.s32.totalorder %s137, %s139
      %p143 = scmp.eq.s32.totalorder %s19, 0
      %p144 = por %p142, %p143
      %p145 = scmp.ne.s32.totalorder %s137, %s139
      %p146 = scmp.eq.s32.totalorder %s24, 1
      %p147 = por %p145, %p146
      %p148 = scmp.ne.s32.totalorder %s139, %s140
      %p149 = scmp.eq.s32.totalorder %s24, 0
      %p150 = por %p148, %p149
      %p151 = scmp.ne.s32.totalorder %s139, %s140
      %p152 = scmp.eq.s32.totalorder %s25, 1
      %p153 = por %p151, %p152
      %p155 = scmp.ne.s32.totalorder %s140, %s154
      %p156 = scmp.eq.s32.totalorder %s25, 0
      %p157 = por %p155, %p156
      %s159 = sadd.s32 %s158, 1
      %p162 = scmp.eq.s32.totalorder %s19, 1
      %p163 = scmp.ne.s32.totalorder %s158, %s160
      %p164 = scmp.eq.s32.totalorder %s19, 0
      %p165 = por %p163, %p164
      %p166 = scmp.ne.s32.totalorder %s158, %s160
      %p167 = scmp.eq.s32.totalorder %s24, 1
      %p168 = por %p166, %p167
      %p169 = scmp.ne.s32.totalorder %s160, %s161
      %p170 = scmp.eq.s32.totalorder %s24, 0
      %p171 = por %p169, %p170
      %p172 = scmp.ne.s32.totalorder %s160, %s161
      %p173 = scmp.eq.s32.totalorder %s25, 1
      %p174 = por %p172, %p173
      %p176 = scmp.ne.s32.totalorder %s161, %s175
      %p177 = scmp.eq.s32.totalorder %s25, 0
      %p178 = por %p176, %p177
      %s180 = sadd.s32 %s179, 1
      %p183 = scmp.eq.s32.totalorder %s19, 1
      %p184 = scmp.ne.s32.totalorder %s179, %s181
      %p185 = scmp.eq.s32.totalorder %s19, 0
      %p186 = por %p184, %p185
      %p187 = scmp.ne.s32.totalorder %s179, %s181
      %p188 = scmp.eq.s32.totalorder %s24, 1
      %p189 = por %p187, %p188
      %p190 = scmp.ne.s32.totalorder %s181, %s182
      %p191 = scmp.eq.s32.totalorder %s24, 0
      %p192 = por %p190, %p191
      %p193 = scmp.ne.s32.totalorder %s181, %s182
      %p194 = scmp.eq.s32.totalorder %s25, 1
      %p195 = por %p193, %p194
      %p197 = scmp.ne.s32.totalorder %s182, %s196
      %p198 = scmp.eq.s32.totalorder %s25, 0
      %p199 = por %p197, %p198
      %s201 = sadd.s32 %s200, 1
      %p204 = scmp.eq.s32.totalorder %s19, 1
      %p205 = scmp.ne.s32.totalorder %s200, %s202
      %p206 = scmp.eq.s32.totalorder %s19, 0
      %p207 = por %p205, %p206
      %p208 = scmp.ne.s32.totalorder %s200, %s202
      %p209 = scmp.eq.s32.totalorder %s24, 1
      %p210 = por %p208, %p209
      %p211 = scmp.ne.s32.totalorder %s202, %s203
      %p212 = scmp.eq.s32.totalorder %s24, 0
      %p213 = por %p211, %p212
      %p214 = scmp.ne.s32.totalorder %s202, %s203
      %p215 = scmp.eq.s32.totalorder %s25, 1
      %p216 = por %p214, %p215
      %p218 = scmp.ne.s32.totalorder %s203, %s217
      %p219 = scmp.eq.s32.totalorder %s25, 0
      %p220 = por %p218, %p219
      %s222 = sadd.s32 %s221, 1
      %p225 = scmp.eq.s32.totalorder %s19, 1
      %p226 = scmp.ne.s32.totalorder %s221, %s223
      %p227 = scmp.eq.s32.totalorder %s19, 0
      %p228 = por %p226, %p227
      %p229 = scmp.ne.s32.totalorder %s221, %s223
      %p230 = scmp.eq.s32.totalorder %s24, 1
      %p231 = por %p229, %p230
      %p232 = scmp.ne.s32.totalorder %s223, %s224
      %p233 = scmp.eq.s32.totalorder %s24, 0
      %p234 = por %p232, %p233
      %p235 = scmp.ne.s32.totalorder %s223, %s224
      %p236 = scmp.eq.s32.totalorder %s25, 1
      %p237 = por %p235, %p236
      %p239 = scmp.ne.s32.totalorder %s224, %s238
      %p240 = scmp.eq.s32.totalorder %s25, 0
      %p241 = por %p239, %p240
      %s243 = sadd.s32 %s242, 1
      %p246 = scmp.eq.s32.totalorder %s19, 1
      %p247 = scmp.ne.s32.totalorder %s242, %s244
      %p248 = scmp.eq.s32.totalorder %s19, 0
      %p249 = por %p247, %p248
      %p250 = scmp.ne.s32.totalorder %s242, %s244
      %p251 = scmp.eq.s32.totalorder %s24, 1
      %p252 = por %p250, %p251
      %p253 = scmp.ne.s32.totalorder %s244, %s245
      %p254 = scmp.eq.s32.totalorder %s24, 0
      %p255 = por %p253, %p254
      %p256 = scmp.ne.s32.totalorder %s244, %s245
      %p257 = scmp.eq.s32.totalorder %s25, 1
      %p258 = por %p256, %p257
      %p260 = scmp.ne.s32.totalorder %s245, %s259
      %p261 = scmp.eq.s32.totalorder %s25, 0
      %p262 = por %p260, %p261
      %s263 = ssub.s32 %s19, %s26
      %p264 = scmp.eq.s32.totalorder %s263, 0
      %s266 = sadd.s32 %s265, 1
      %s267 = scalar_select %p264, %s265, %s266
      %p270 = pneg %p264
      %p271 = scmp.eq.s32.totalorder %s19, 1
      %p272 = por %p270, %p271
      %p273 = scmp.ne.s32.totalorder %s265, %s268
      %p274 = scmp.eq.s32.totalorder %s19, 0
      %p275 = por %p273, %p274
      %p276 = scmp.ne.s32.totalorder %s265, %s268
      %p277 = scmp.eq.s32.totalorder %s24, 1
      %p278 = por %p276, %p277
      %p279 = scmp.ne.s32.totalorder %s268, %s269
      %p280 = scmp.eq.s32.totalorder %s24, 0
      %p281 = por %p279, %p280
      %p282 = scmp.ne.s32.totalorder %s268, %s269
      %p283 = scmp.eq.s32.totalorder %s25, 1
      %p284 = por %p282, %p283
      %p286 = scmp.ne.s32.totalorder %s269, %s285
      %p287 = scmp.eq.s32.totalorder %s25, 0
      %p288 = por %p286, %p287
      %p289 = scmp.le.s32.totalorder 1, %s19
      %p290 = scmp.lt.s32.totalorder %s19, 3
      %p291 = pnand %p289, %p290
      %p292 = pneg %p291
      // Predicated region
      $region9: #{tpu_custom_call.1} parent=5 // pred_check
        _
      $region10: #{tpu_custom_call.1} parent=5 // pred_check_branch
        %294 = sbr.rel (%p291) target = $region12
      $region11: #{tpu_custom_call.1} parent=5 // pred_region
        %s295 = ssub.s32 %s19, 1
        // Predicated region
        $region13: #{tpu_custom_call.1} parent=11 // pred_check
          %p296 = pneg %p66
        $region14: #{tpu_custom_call.1} parent=11 // pred_check_branch
          %298 = sbr.rel (%p296) target = $region16
        $region15: #{tpu_custom_call.1} parent=11 // pred_region
          %s300 = ssub.s32 2048, 2048
          %301 = vsyncadd [#allocation3], %s300
          %s302 = sshll.u32 [#allocation2], 4
          %s303 = int_to_ptr.vmem [resolvable:$true] %s302
          %308 = dma.hbm_to_vmem [thread:$0]  %s1, 2048, %s303, [#allocation3], 128, 128, 8
        $region16: #{tpu_custom_call.1} parent=11 // pred_fallthru
          _
        // Predicated region
        $region17: #{tpu_custom_call.1} parent=11 // pred_check
          %p309 = pneg %p87
        $region18: #{tpu_custom_call.1} parent=11 // pred_check_branch
          %311 = sbr.rel (%p309) target = $region20
        $region19: #{tpu_custom_call.1} parent=11 // pred_region
          _
        $region20: #{tpu_custom_call.1} parent=11 // pred_fallthru
          _
        // Predicated region
        $region21: #{tpu_custom_call.1} parent=11 // pred_check
          %p312 = pneg %p108
        $region22: #{tpu_custom_call.1} parent=11 // pred_check_branch
          %314 = sbr.rel (%p312) target = $region24
        $region23: #{tpu_custom_call.1} parent=11 // pred_region
          _
        $region24: #{tpu_custom_call.1} parent=11 // pred_fallthru
          _
        // Predicated region
        $region25: #{tpu_custom_call.1} parent=11 // pred_check
          %p315 = pneg %p129
        $region26: #{tpu_custom_call.1} parent=11 // pred_check_branch
          %317 = sbr.rel (%p315) target = $region28
        $region27: #{tpu_custom_call.1} parent=11 // pred_region
          _
        $region28: #{tpu_custom_call.1} parent=11 // pred_fallthru
          _
        // Predicated region
        $region29: #{tpu_custom_call.1} parent=11 // pred_check
          %p318 = pneg %p150
        $region30: #{tpu_custom_call.1} parent=11 // pred_check_branch
          %320 = sbr.rel (%p318) target = $region32
        $region31: #{tpu_custom_call.1} parent=11 // pred_region
          %s322 = ssub.s32 4096, 4096
          %323 = vsyncadd [#allocation5], %s322
          %s324 = sshll.u32 [#allocation4], 4
          %s325 = int_to_ptr.vmem [resolvable:$true] %s324
          %330 = dma.hbm_to_vmem [thread:$0]  %s5, 4096, %s325, [#allocation5], 128, 128, 8
        $region32: #{tpu_custom_call.1} parent=11 // pred_fallthru
          _
        // Predicated region
        $region33: #{tpu_custom_call.1} parent=11 // pred_check
          %p331 = pneg %p171
        $region34: #{tpu_custom_call.1} parent=11 // pred_check_branch
          %333 = sbr.rel (%p331) target = $region36
        $region35: #{tpu_custom_call.1} parent=11 // pred_region
          _
        $region36: #{tpu_custom_call.1} parent=11 // pred_fallthru
          _
        // Predicated region
        $region37: #{tpu_custom_call.1} parent=11 // pred_check
          %p334 = pneg %p192
        $region38: #{tpu_custom_call.1} parent=11 // pred_check_branch
          %336 = sbr.rel (%p334) target = $region40
        $region39: #{tpu_custom_call.1} parent=11 // pred_region
          _
        $region40: #{tpu_custom_call.1} parent=11 // pred_fallthru
          _
        // Predicated region
        $region41: #{tpu_custom_call.1} parent=11 // pred_check
          %p337 = pneg %p213
        $region42: #{tpu_custom_call.1} parent=11 // pred_check_branch
          %339 = sbr.rel (%p337) target = $region44
        $region43: #{tpu_custom_call.1} parent=11 // pred_region
          _
        $region44: #{tpu_custom_call.1} parent=11 // pred_fallthru
          _
        // Predicated region
        $region45: #{tpu_custom_call.1} parent=11 // pred_check
          %p340 = pneg %p234
        $region46: #{tpu_custom_call.1} parent=11 // pred_check_branch
          %342 = sbr.rel (%p340) target = $region48
        $region47: #{tpu_custom_call.1} parent=11 // pred_region
          _
        $region48: #{tpu_custom_call.1} parent=11 // pred_fallthru
          _
        // Predicated region
        $region49: #{tpu_custom_call.1} parent=11 // pred_check
          %p343 = pneg %p255
        $region50: #{tpu_custom_call.1} parent=11 // pred_check_branch
          %345 = sbr.rel (%p343) target = $region52
        $region51: #{tpu_custom_call.1} parent=11 // pred_region
          _
        $region52: #{tpu_custom_call.1} parent=11 // pred_fallthru
          _
      $region12: #{tpu_custom_call.1} parent=5 // pred_fallthru
        _
      %p346 = scmp.lt.s32.totalorder %s19, 2
      // Predicated region
      $region53: #{tpu_custom_call.1} parent=5 // pred_check
        %p347 = pneg %p346
      $region54: #{tpu_custom_call.1} parent=5 // pred_check_branch
        %349 = sbr.rel (%p347) target = $region56
      $region55: #{tpu_custom_call.1} parent=5 // pred_region
        // Predicated region
        $region57: #{tpu_custom_call.1} parent=55 // pred_check
          %p350 = pneg %p39
        $region58: #{tpu_custom_call.1} parent=55 // pred_check_branch
          %352 = sbr.rel (%p350) target = $region60
        $region59: #{tpu_custom_call.1} parent=55 // pred_region
          %s353 = smul.u32 16, %s19
          %p354 = scmp.lt.s32.totalorder %s353, 31
          %s355 = scalar_select %p354, %s353, 31
          %s356 = smul.addr %s355, 4
          %s357 = scalar_lea.vmem %s0, %s356
          %s358 = smul.u32 16, %s19
        $region60: #{tpu_custom_call.1} parent=55 // pred_fallthru
          _
      $region56: #{tpu_custom_call.1} parent=5 // pred_fallthru
        _
      %p359 = scmp.le.s32.totalorder 1, %s19
      %p360 = scmp.lt.s32.totalorder %s19, 3
      %p361 = pnand %p359, %p360
      %p362 = pneg %p361
      // Predicated region
      $region61: #{tpu_custom_call.1} parent=5 // pred_check
        _
      $region62: #{tpu_custom_call.1} parent=5 // pred_check_branch
        %364 = sbr.rel (%p361) target = $region64
      $region63: #{tpu_custom_call.1} parent=5 // pred_region
        %s365 = ssub.s32 %s19, 1
        // Predicated region
        $region65: #{tpu_custom_call.1} parent=63 // pred_check
          %p366 = pneg %p66
        $region66: #{tpu_custom_call.1} parent=63 // pred_check_branch
          %368 = sbr.rel (%p366) target = $region68
        $region67: #{tpu_custom_call.1} parent=63 // pred_region
          %369 = dma.done [#allocation3], 2048
        $region68: #{tpu_custom_call.1} parent=63 // pred_fallthru
          _
        // Predicated region
        $region69: #{tpu_custom_call.1} parent=63 // pred_check
          %p370 = pneg %p150
        $region70: #{tpu_custom_call.1} parent=63 // pred_check_branch
          %372 = sbr.rel (%p370) target = $region72
        $region71: #{tpu_custom_call.1} parent=63 // pred_region
          %373 = dma.done [#allocation5], 4096
        $region72: #{tpu_custom_call.1} parent=63 // pred_fallthru
          _
        %s374 = smul.u32 16, %s24
        %p375 = scmp.lt.s32.totalorder %s374, 31
        %s376 = scalar_select %p375, %s374, 31
        %s377 = smul.addr %s376, 4
        %s378 = scalar_lea.vmem %s0, %s377
        %p379 = pneg %p45
        %p380 = pneg %p42
        %p381 = pneg %p66
        %p382 = pneg %p63
        %p383 = pneg %p87
        %p384 = pneg %p84
        %p385 = pneg %p108
        %p386 = pneg %p105
        %p387 = pneg %p129
        %p388 = pneg %p126
        %p389 = pneg %p150
        %p390 = pneg %p147
        %p391 = pneg %p171
        %p392 = pneg %p168
        %p393 = pneg %p192
        %p394 = pneg %p189
        %p395 = pneg %p213
        %p396 = pneg %p210
        %p397 = pneg %p234
        %p398 = pneg %p231
        %p399 = pneg %p255
        %p400 = pneg %p252
        %p401 = pneg %p281
        %p402 = pneg %p278
        %s403 = smul.u32 16, %s24
        %p404 = scmp.lt.s32.totalorder %s403, 31
        %s405 = scalar_select %p404, %s403, 31
        %s406 = smul.addr %s405, 8
        %s407 = scalar_lea.vmem %s11, %s406
        %s408 = smul.u32 16, %s24
        %p409 = scmp.lt.s32.totalorder %s408, 31
        %s410 = scalar_select %p409, %s408, 31
        %s411 = smul.addr %s410, 4
        %s412 = scalar_lea.vmem %s0, %s411
        %s413 = smul.u32 16, %s24
        %s414 = smul.u32 16, %s24
        %p415 = scmp.lt.s32.totalorder %s414, 31
        %s416 = scalar_select %p415, %s414, 31
        %s417 = smul.addr %s416, 8
        %s418 = scalar_lea.vmem %s11, %s417
        %s419 = smul.u32 16, %s24
        %v421 = vld [vmem:[%s412] sm:$0xf]
        %v422 = vld [vmem:[%s412 + $0x4] sm:$0xf]
        %v423 = vld [vmem:[%s412 + $0x8] sm:$0xf]
        %v424 = vld [vmem:[%s412 + $0xc] sm:$0xf]
        %v425 = vld [vmem:[%s412 + $0x10] sm:$0xf]
        %v426 = vld [vmem:[%s412 + $0x14] sm:$0xf]
        %v427 = vld [vmem:[%s412 + $0x18] sm:$0xf]
        %v428 = vld [vmem:[%s412 + $0x1c] sm:$0xf]
        %v429 = vld [vmem:[%s412 + $0x20] sm:$0xf]
        %v430 = vld [vmem:[%s412 + $0x24] sm:$0xf]
        %v431 = vld [vmem:[%s412 + $0x28] sm:$0xf]
        %v432 = vld [vmem:[%s412 + $0x2c] sm:$0xf]
        %v433 = vld [vmem:[%s412 + $0x30] sm:$0xf]
        %v434 = vld [vmem:[%s412 + $0x34] sm:$0xf]
        %v435 = vld [vmem:[%s412 + $0x38] sm:$0xf]
        %v436 = vld [vmem:[%s412 + $0x3c] sm:$0xf]
        %v437 = vld [vmem:[#allocation2] sm:$0xff]
        %v438 = vld [vmem:[#allocation2 + $0x8] sm:$0xff]
        %v439 = vld [vmem:[#allocation2 + $0x10] sm:$0xff]
        %v440 = vld [vmem:[#allocation2 + $0x18] sm:$0xff]
        %v441 = vld [vmem:[#allocation2 + $0x20] sm:$0xff]
        %v442 = vld [vmem:[#allocation2 + $0x28] sm:$0xff]
        %v443 = vld [vmem:[#allocation2 + $0x30] sm:$0xff]
        %v444 = vld [vmem:[#allocation2 + $0x38] sm:$0xff]
        %v445 = vld [vmem:[#allocation2 + $0x40] sm:$0xff]
        %v446 = vld [vmem:[#allocation2 + $0x48] sm:$0xff]
        %v447 = vld [vmem:[#allocation2 + $0x50] sm:$0xff]
        %v448 = vld [vmem:[#allocation2 + $0x58] sm:$0xff]
        %v449 = vld [vmem:[#allocation2 + $0x60] sm:$0xff]
        %v450 = vld [vmem:[#allocation2 + $0x68] sm:$0xff]
        %v451 = vld [vmem:[#allocation2 + $0x70] sm:$0xff]
        %v452 = vld [vmem:[#allocation2 + $0x78] sm:$0xff]
        %v453 = vld [vmem:[%s2] sm:$0x3]
        %v455 = vlaneseq
        %v456 = vshrl.u32 %v455, 7
        %v457 = vsub.s32 0, %v456
        %v458 = vrot.slane %v453, %v457
        %v459 = vlaneseq
        %v460 = vshrl.u32 %v459, 7
        %v461 = vsub.s32 1, %v460
        %v462 = vrot.slane %v453, %v461
        %v481 = vunpack.c.l.b16 %v421
        %v482 = vunpack.c.l.b16 %v422
        %v483 = vunpack.c.l.b16 %v423
        %v484 = vunpack.c.l.b16 %v424
        %v485 = vunpack.c.l.b16 %v425
        %v486 = vunpack.c.l.b16 %v426
        %v487 = vunpack.c.l.b16 %v427
        %v488 = vunpack.c.l.b16 %v428
        %v489 = vunpack.c.l.b16 %v429
        %v490 = vunpack.c.l.b16 %v430
        %v491 = vunpack.c.l.b16 %v431
        %v492 = vunpack.c.l.b16 %v432
        %v493 = vunpack.c.l.b16 %v433
        %v494 = vunpack.c.l.b16 %v434
        %v495 = vunpack.c.l.b16 %v435
        %v496 = vunpack.c.l.b16 %v436
        %v497 = vpack.c.b16 %v482, %v481
        %v498 = vpack.c.b16 %v484, %v483
        %v499 = vpack.c.b16 %v486, %v485
        %v500 = vpack.c.b16 %v488, %v487
        %v501 = vpack.c.b16 %v490, %v489
        %v502 = vpack.c.b16 %v492, %v491
        %v503 = vpack.c.b16 %v494, %v493
        %v504 = vpack.c.b16 %v496, %v495
        %v529 = vunpack.c.l.b16 %v437
        %v530 = vunpack.c.h.b16 %v437
        %v531 = vunpack.c.l.b16 %v438
        %v532 = vunpack.c.h.b16 %v438
        %v533 = vunpack.c.l.b16 %v439
        %v534 = vunpack.c.h.b16 %v439
        %v535 = vunpack.c.l.b16 %v440
        %v536 = vunpack.c.h.b16 %v440
        %v537 = vunpack.c.l.b16 %v441
        %v538 = vunpack.c.h.b16 %v441
        %v539 = vunpack.c.l.b16 %v442
        %v540 = vunpack.c.h.b16 %v442
        %v541 = vunpack.c.l.b16 %v443
        %v542 = vunpack.c.h.b16 %v443
        %v543 = vunpack.c.l.b16 %v444
        %v544 = vunpack.c.h.b16 %v444
        %v545 = vunpack.c.l.b16 %v445
        %v546 = vunpack.c.h.b16 %v445
        %v547 = vunpack.c.l.b16 %v446
        %v548 = vunpack.c.h.b16 %v446
        %v549 = vunpack.c.l.b16 %v447
        %v550 = vunpack.c.h.b16 %v447
        %v551 = vunpack.c.l.b16 %v448
        %v552 = vunpack.c.h.b16 %v448
        %v553 = vunpack.c.l.b16 %v449
        %v554 = vunpack.c.h.b16 %v449
        %v555 = vunpack.c.l.b16 %v450
        %v556 = vunpack.c.h.b16 %v450
        %v557 = vunpack.c.l.b16 %v451
        %v558 = vunpack.c.h.b16 %v451
        %v559 = vunpack.c.l.b16 %v452
        %v560 = vunpack.c.h.b16 %v452
        %v561 = vpack.c.b16 %v531, %v529
        %v562 = vpack.c.b16 %v532, %v530
        %v563 = vpack.c.b16 %v535, %v533
        %v564 = vpack.c.b16 %v536, %v534
        %v565 = vpack.c.b16 %v539, %v537
        %v566 = vpack.c.b16 %v540, %v538
        %v567 = vpack.c.b16 %v543, %v541
        %v568 = vpack.c.b16 %v544, %v542
        %v569 = vpack.c.b16 %v547, %v545
        %v570 = vpack.c.b16 %v548, %v546
        %v571 = vpack.c.b16 %v551, %v549
        %v572 = vpack.c.b16 %v552, %v550
        %v573 = vpack.c.b16 %v555, %v553
        %v574 = vpack.c.b16 %v556, %v554
        %v575 = vpack.c.b16 %v559, %v557
        %v576 = vpack.c.b16 %v560, %v558
        %593 = vmatprep.subr.bf16.mxu0 %v576
        %594 = vmatpush1.bf16.msra.mxu0 %v575
        %595 = vmatprep.subr.bf16.mxu0 %v574
        %596 = vmatpush1.bf16.msra.mxu0 %v573
        %597 = vmatprep.subr.bf16.mxu0 %v572
        %598 = vmatpush1.bf16.msra.mxu0 %v571
        %599 = vmatprep.subr.bf16.mxu0 %v570
        %600 = vmatpush1.bf16.msra.mxu0 %v569
        %601 = vmatprep.subr.bf16.mxu0 %v568
        %602 = vmatpush1.bf16.msra.mxu0 %v567
        %603 = vmatprep.subr.bf16.mxu0 %v566
        %604 = vmatpush1.bf16.msra.mxu0 %v565
        %605 = vmatprep.subr.bf16.mxu0 %v564
        %606 = vmatpush1.bf16.msra.mxu0 %v563
        %607 = vmatprep.subr.bf16.mxu0 %v562
        %608 = vmatpush1.bf16.msra.mxu0 %v561
        %609 = vmatprep.subr.bf16.mxu0 0
        %610 = vmatpush2.bf16.msra.mxu0 0
        %611 = vmatprep.subr.bf16.mxu0 0
        %612 = vmatpush2.bf16.msra.mxu0 0
        %613 = vmatprep.subr.bf16.mxu0 0
        %614 = vmatpush2.bf16.msra.mxu0 0
        %615 = vmatprep.subr.bf16.mxu0 0
        %616 = vmatpush2.bf16.msra.mxu0 0
        %617 = vmatprep.subr.bf16.mxu0 0
        %618 = vmatpush2.bf16.msra.mxu0 0
        %619 = vmatprep.subr.bf16.mxu0 0
        %620 = vmatpush2.bf16.msra.mxu0 0
        %621 = vmatprep.subr.bf16.mxu0 0
        %622 = vmatpush2.bf16.msra.mxu0 0
        %623 = vmatprep.subr.bf16.mxu0 0
        %624 = vmatpush2.bf16.msra.mxu0 0
        %625 = vmatprep.mubr.bf16.mxu0 0
        %626 = vmatmul.mubr.bf16.gmra.mxu0 %v497
        %v627 = vpop.f32.mrf.mxu0
        %v628 = vadd.f32 %v458, %v627
        %v629 = vpop.f32.mrf.mxu0
        %v630 = vadd.f32 %v462, %v629
        %v631 = vpop.f32.mrf.mxu0
        %v632 = vadd.f32 %v458, %v631
        %v633 = vpop.f32.mrf.mxu0
        %v634 = vadd.f32 %v462, %v633
        %635 = vmatprep.mubr.bf16.mxu0 0
        %636 = vmatmul.mubr.bf16.gmra.mxu0 %v498
        %v637 = vpop.f32.mrf.mxu0
        %v638 = vadd.f32 %v458, %v637
        %v639 = vpop.f32.mrf.mxu0
        %v640 = vadd.f32 %v462, %v639
        %v641 = vpop.f32.mrf.mxu0
        %v642 = vadd.f32 %v458, %v641
        %v643 = vpop.f32.mrf.mxu0
        %v644 = vadd.f32 %v462, %v643
        %645 = vmatprep.mubr.bf16.mxu0 0
        %646 = vmatmul.mubr.bf16.gmra.mxu0 %v499
        %v647 = vpop.f32.mrf.mxu0
        %v648 = vadd.f32 %v458, %v647
        %v649 = vpop.f32.mrf.mxu0
        %v650 = vadd.f32 %v462, %v649
        %v651 = vpop.f32.mrf.mxu0
        %v652 = vadd.f32 %v458, %v651
        %v653 = vpop.f32.mrf.mxu0
        %v654 = vadd.f32 %v462, %v653
        %655 = vmatprep.mubr.bf16.mxu0 0
        %656 = vmatmul.mubr.bf16.gmra.mxu0 %v500
        %v657 = vpop.f32.mrf.mxu0
        %v658 = vadd.f32 %v458, %v657
        %v659 = vpop.f32.mrf.mxu0
        %v660 = vadd.f32 %v462, %v659
        %v661 = vpop.f32.mrf.mxu0
        %v662 = vadd.f32 %v458, %v661
        %v663 = vpop.f32.mrf.mxu0
        %v664 = vadd.f32 %v462, %v663
        %665 = vmatprep.mubr.bf16.mxu0 0
        %666 = vmatmul.mubr.bf16.gmra.mxu0 %v501
        %v667 = vpop.f32.mrf.mxu0
        %v668 = vadd.f32 %v458, %v667
        %v669 = vpop.f32.mrf.mxu0
        %v670 = vadd.f32 %v462, %v669
        %v671 = vpop.f32.mrf.mxu0
        %v672 = vadd.f32 %v458, %v671
        %v673 = vpop.f32.mrf.mxu0
        %v674 = vadd.f32 %v462, %v673
        %675 = vmatprep.mubr.bf16.mxu0 0
        %676 = vmatmul.mubr.bf16.gmra.mxu0 %v502
        %v677 = vpop.f32.mrf.mxu0
        %v678 = vadd.f32 %v458, %v677
        %v679 = vpop.f32.mrf.mxu0
        %v680 = vadd.f32 %v462, %v679
        %v681 = vpop.f32.mrf.mxu0
        %v682 = vadd.f32 %v458, %v681
        %v683 = vpop.f32.mrf.mxu0
        %v684 = vadd.f32 %v462, %v683
        %685 = vmatprep.mubr.bf16.mxu0 0
        %686 = vmatmul.mubr.bf16.gmra.mxu0 %v503
        %v687 = vpop.f32.mrf.mxu0
        %v688 = vadd.f32 %v458, %v687
        %v689 = vpop.f32.mrf.mxu0
        %v690 = vadd.f32 %v462, %v689
        %v691 = vpop.f32.mrf.mxu0
        %v692 = vadd.f32 %v458, %v691
        %v693 = vpop.f32.mrf.mxu0
        %v694 = vadd.f32 %v462, %v693
        %695 = vmatprep.mubr.bf16.mxu0 0
        %696 = vmatmul.mubr.bf16.gmra.mxu0 %v504
        %v697 = vpop.f32.mrf.mxu0
        %v698 = vadd.f32 %v458, %v697
        %v699 = vpop.f32.mrf.mxu0
        %v700 = vadd.f32 %v462, %v699
        %v701 = vpop.f32.mrf.mxu0
        %v702 = vadd.f32 %v458, %v701
        %v703 = vpop.f32.mrf.mxu0
        %v704 = vadd.f32 %v462, %v703
        %705 = vdwg.mxu0
        %v706 = vld [vmem:[%s3] sm:$0x3]
        %v707 = vld [vmem:[%s4] sm:$0x3]
        %v708 = vadd.f32 %v628, %v630
        %709 = vadd.xlane.f32.xlu0 %v708
        %v710 = vpop.xlane.xlu0 %709
        %v711 = vadd.f32 %v632, %v634
        %712 = vadd.xlane.f32.xlu0 %v711
        %v713 = vpop.xlane.xlu0 %712
        %v714 = vadd.f32 %v638, %v640
        %715 = vadd.xlane.f32.xlu0 %v714
        %v716 = vpop.xlane.xlu0 %715
        %v717 = vadd.f32 %v642, %v644
        %718 = vadd.xlane.f32.xlu0 %v717
        %v719 = vpop.xlane.xlu0 %718
        %v720 = vadd.f32 %v648, %v650
        %721 = vadd.xlane.f32.xlu0 %v720
        %v722 = vpop.xlane.xlu0 %721
        %v723 = vadd.f32 %v652, %v654
        %724 = vadd.xlane.f32.xlu0 %v723
        %v725 = vpop.xlane.xlu0 %724
        %v726 = vadd.f32 %v658, %v660
        %727 = vadd.xlane.f32.xlu0 %v726
        %v728 = vpop.xlane.xlu0 %727
        %v729 = vadd.f32 %v662, %v664
        %730 = vadd.xlane.f32.xlu0 %v729
        %v731 = vpop.xlane.xlu0 %730
        %v732 = vadd.f32 %v668, %v670
        %733 = vadd.xlane.f32.xlu0 %v732
        %v734 = vpop.xlane.xlu0 %733
        %v735 = vadd.f32 %v672, %v674
        %736 = vadd.xlane.f32.xlu0 %v735
        %v737 = vpop.xlane.xlu0 %736
        %v738 = vadd.f32 %v678, %v680
        %739 = vadd.xlane.f32.xlu0 %v738
        %v740 = vpop.xlane.xlu0 %739
        %v741 = vadd.f32 %v682, %v684
        %742 = vadd.xlane.f32.xlu0 %v741
        %v743 = vpop.xlane.xlu0 %742
        %v744 = vadd.f32 %v688, %v690
        %745 = vadd.xlane.f32.xlu0 %v744
        %v746 = vpop.xlane.xlu0 %745
        %v747 = vadd.f32 %v692, %v694
        %748 = vadd.xlane.f32.xlu0 %v747
        %v749 = vpop.xlane.xlu0 %748
        %v750 = vadd.f32 %v698, %v700
        %751 = vadd.xlane.f32.xlu0 %v750
        %v752 = vpop.xlane.xlu0 %751
        %v753 = vadd.f32 %v702, %v704
        %754 = vadd.xlane.f32.xlu0 %v753
        %v755 = vpop.xlane.xlu0 %754
        %v756 = vrcp.pop 256.0
        %v757 = vmul.f32 %v710, %v756
        %v758 = vmul.f32 %v713, %v756
        %v759 = vmul.f32 %v716, %v756
        %v760 = vmul.f32 %v719, %v756
        %v761 = vmul.f32 %v722, %v756
        %v762 = vmul.f32 %v725, %v756
        %v763 = vmul.f32 %v728, %v756
        %v764 = vmul.f32 %v731, %v756
        %v765 = vmul.f32 %v734, %v756
        %v766 = vmul.f32 %v737, %v756
        %v767 = vmul.f32 %v740, %v756
        %v768 = vmul.f32 %v743, %v756
        %v769 = vmul.f32 %v746, %v756
        %v770 = vmul.f32 %v749, %v756
        %v771 = vmul.f32 %v752, %v756
        %v772 = vmul.f32 %v755, %v756
        %v773 = vsub.f32 %v628, %v757
        %v774 = vsub.f32 %v630, %v757
        %v775 = vsub.f32 %v632, %v758
        %v776 = vsub.f32 %v634, %v758
        %v777 = vsub.f32 %v638, %v759
        %v778 = vsub.f32 %v640, %v759
        %v779 = vsub.f32 %v642, %v760
        %v780 = vsub.f32 %v644, %v760
        %v781 = vsub.f32 %v648, %v761
        %v782 = vsub.f32 %v650, %v761
        %v783 = vsub.f32 %v652, %v762
        %v784 = vsub.f32 %v654, %v762
        %v785 = vsub.f32 %v658, %v763
        %v786 = vsub.f32 %v660, %v763
        %v787 = vsub.f32 %v662, %v764
        %v788 = vsub.f32 %v664, %v764
        %v789 = vsub.f32 %v668, %v765
        %v790 = vsub.f32 %v670, %v765
        %v791 = vsub.f32 %v672, %v766
        %v792 = vsub.f32 %v674, %v766
        %v793 = vsub.f32 %v678, %v767
        %v794 = vsub.f32 %v680, %v767
        %v795 = vsub.f32 %v682, %v768
        %v796 = vsub.f32 %v684, %v768
        %v797 = vsub.f32 %v688, %v769
        %v798 = vsub.f32 %v690, %v769
        %v799 = vsub.f32 %v692, %v770
        %v800 = vsub.f32 %v694, %v770
        %v801 = vsub.f32 %v698, %v771
        %v802 = vsub.f32 %v700, %v771
        %v803 = vsub.f32 %v702, %v772
        %v804 = vsub.f32 %v704, %v772
        %v805 = vmul.f32 %v773, %v773
        %v806 = vmul.f32 %v774, %v774
        %v807 = vmul.f32 %v775, %v775
        %v808 = vmul.f32 %v776, %v776
        %v809 = vmul.f32 %v777, %v777
        %v810 = vmul.f32 %v778, %v778
        %v811 = vmul.f32 %v779, %v779
        %v812 = vmul.f32 %v780, %v780
        %v813 = vmul.f32 %v781, %v781
        %v814 = vmul.f32 %v782, %v782
        %v815 = vmul.f32 %v783, %v783
        %v816 = vmul.f32 %v784, %v784
        %v817 = vmul.f32 %v785, %v785
        %v818 = vmul.f32 %v786, %v786
        %v819 = vmul.f32 %v787, %v787
        %v820 = vmul.f32 %v788, %v788
        %v821 = vmul.f32 %v789, %v789
        %v822 = vmul.f32 %v790, %v790
        %v823 = vmul.f32 %v791, %v791
        %v824 = vmul.f32 %v792, %v792
        %v825 = vmul.f32 %v793, %v793
        %v826 = vmul.f32 %v794, %v794
        %v827 = vmul.f32 %v795, %v795
        %v828 = vmul.f32 %v796, %v796
        %v829 = vmul.f32 %v797, %v797
        %v830 = vmul.f32 %v798, %v798
        %v831 = vmul.f32 %v799, %v799
        %v832 = vmul.f32 %v800, %v800
        %v833 = vmul.f32 %v801, %v801
        %v834 = vmul.f32 %v802, %v802
        %v835 = vmul.f32 %v803, %v803
        %v836 = vmul.f32 %v804, %v804
        %v837 = vadd.f32 %v805, %v806
        %838 = vadd.xlane.f32.xlu0 %v837
        %v839 = vpop.xlane.xlu0 %838
        %v840 = vadd.f32 %v807, %v808
        %841 = vadd.xlane.f32.xlu0 %v840
        %v842 = vpop.xlane.xlu0 %841
        %v843 = vadd.f32 %v809, %v810
        %844 = vadd.xlane.f32.xlu0 %v843
        %v845 = vpop.xlane.xlu0 %844
        %v846 = vadd.f32 %v811, %v812
        %847 = vadd.xlane.f32.xlu0 %v846
        %v848 = vpop.xlane.xlu0 %847
        %v849 = vadd.f32 %v813, %v814
        %850 = vadd.xlane.f32.xlu0 %v849
        %v851 = vpop.xlane.xlu0 %850
        %v852 = vadd.f32 %v815, %v816
        %853 = vadd.xlane.f32.xlu0 %v852
        %v854 = vpop.xlane.xlu0 %853
        %v855 = vadd.f32 %v817, %v818
        %856 = vadd.xlane.f32.xlu0 %v855
        %v857 = vpop.xlane.xlu0 %856
        %v858 = vadd.f32 %v819, %v820
        %859 = vadd.xlane.f32.xlu0 %v858
        %v860 = vpop.xlane.xlu0 %859
        %v861 = vadd.f32 %v821, %v822
        %862 = vadd.xlane.f32.xlu0 %v861
        %v863 = vpop.xlane.xlu0 %862
        %v864 = vadd.f32 %v823, %v824
        %865 = vadd.xlane.f32.xlu0 %v864
        %v866 = vpop.xlane.xlu0 %865
        %v867 = vadd.f32 %v825, %v826
        %868 = vadd.xlane.f32.xlu0 %v867
        %v869 = vpop.xlane.xlu0 %868
        %v870 = vadd.f32 %v827, %v828
        %871 = vadd.xlane.f32.xlu0 %v870
        %v872 = vpop.xlane.xlu0 %871
        %v873 = vadd.f32 %v829, %v830
        %874 = vadd.xlane.f32.xlu0 %v873
        %v875 = vpop.xlane.xlu0 %874
        %v876 = vadd.f32 %v831, %v832
        %877 = vadd.xlane.f32.xlu0 %v876
        %v878 = vpop.xlane.xlu0 %877
        %v879 = vadd.f32 %v833, %v834
        %880 = vadd.xlane.f32.xlu0 %v879
        %v881 = vpop.xlane.xlu0 %880
        %v882 = vadd.f32 %v835, %v836
        %883 = vadd.xlane.f32.xlu0 %v882
        %v884 = vpop.xlane.xlu0 %883
        %v885 = vmul.f32 %v839, %v756
        %v886 = vmul.f32 %v842, %v756
        %v887 = vmul.f32 %v845, %v756
        %v888 = vmul.f32 %v848, %v756
        %v889 = vmul.f32 %v851, %v756
        %v890 = vmul.f32 %v854, %v756
        %v891 = vmul.f32 %v857, %v756
        %v892 = vmul.f32 %v860, %v756
        %v893 = vmul.f32 %v863, %v756
        %v894 = vmul.f32 %v866, %v756
        %v895 = vmul.f32 %v869, %v756
        %v896 = vmul.f32 %v872, %v756
        %v897 = vmul.f32 %v875, %v756
        %v898 = vmul.f32 %v878, %v756
        %v899 = vmul.f32 %v881, %v756
        %v900 = vmul.f32 %v884, %v756
        %v901 = vadd.f32 %v885, 1e-05
        %v902 = vadd.f32 %v886, 1e-05
        %v903 = vadd.f32 %v887, 1e-05
        %v904 = vadd.f32 %v888, 1e-05
        %v905 = vadd.f32 %v889, 1e-05
        %v906 = vadd.f32 %v890, 1e-05
        %v907 = vadd.f32 %v891, 1e-05
        %v908 = vadd.f32 %v892, 1e-05
        %v909 = vadd.f32 %v893, 1e-05
        %v910 = vadd.f32 %v894, 1e-05
        %v911 = vadd.f32 %v895, 1e-05
        %v912 = vadd.f32 %v896, 1e-05
        %v913 = vadd.f32 %v897, 1e-05
        %v914 = vadd.f32 %v898, 1e-05
        %v915 = vadd.f32 %v899, 1e-05
        %v916 = vadd.f32 %v900, 1e-05
        %v917 = vrsqrt.pop %v901
        %v918 = vrsqrt.pop %v902
        %v919 = vrsqrt.pop %v903
        %v920 = vrsqrt.pop %v904
        %v921 = vrsqrt.pop %v905
        %v922 = vrsqrt.pop %v906
        %v923 = vrsqrt.pop %v907
        %v924 = vrsqrt.pop %v908
        %v925 = vrsqrt.pop %v909
        %v926 = vrsqrt.pop %v910
        %v927 = vrsqrt.pop %v911
        %v928 = vrsqrt.pop %v912
        %v929 = vrsqrt.pop %v913
        %v930 = vrsqrt.pop %v914
        %v931 = vrsqrt.pop %v915
        %v932 = vrsqrt.pop %v916
        %v933 = vmul.f32 %v773, %v917
        %v934 = vmul.f32 %v774, %v917
        %v935 = vmul.f32 %v775, %v918
        %v936 = vmul.f32 %v776, %v918
        %v937 = vmul.f32 %v777, %v919
        %v938 = vmul.f32 %v778, %v919
        %v939 = vmul.f32 %v779, %v920
        %v940 = vmul.f32 %v780, %v920
        %v941 = vmul.f32 %v781, %v921
        %v942 = vmul.f32 %v782, %v921
        %v943 = vmul.f32 %v783, %v922
        %v944 = vmul.f32 %v784, %v922
        %v945 = vmul.f32 %v785, %v923
        %v946 = vmul.f32 %v786, %v923
        %v947 = vmul.f32 %v787, %v924
        %v948 = vmul.f32 %v788, %v924
        %v949 = vmul.f32 %v789, %v925
        %v950 = vmul.f32 %v790, %v925
        %v951 = vmul.f32 %v791, %v926
        %v952 = vmul.f32 %v792, %v926
        %v953 = vmul.f32 %v793, %v927
        %v954 = vmul.f32 %v794, %v927
        %v955 = vmul.f32 %v795, %v928
        %v956 = vmul.f32 %v796, %v928
        %v957 = vmul.f32 %v797, %v929
        %v958 = vmul.f32 %v798, %v929
        %v959 = vmul.f32 %v799, %v930
        %v960 = vmul.f32 %v800, %v930
        %v961 = vmul.f32 %v801, %v931
        %v962 = vmul.f32 %v802, %v931
        %v963 = vmul.f32 %v803, %v932
        %v964 = vmul.f32 %v804, %v932
        %v966 = vlaneseq
        %v967 = vshrl.u32 %v966, 7
        %v968 = vsub.s32 0, %v967
        %v969 = vrot.slane %v706, %v968
        %v970 = vlaneseq
        %v971 = vshrl.u32 %v970, 7
        %v972 = vsub.s32 1, %v971
        %v973 = vrot.slane %v706, %v972
        %v976 = vmul.f32 %v933, %v969
        %v977 = vmul.f32 %v934, %v973
        %v978 = vmul.f32 %v935, %v969
        %v979 = vmul.f32 %v936, %v973
        %v980 = vmul.f32 %v937, %v969
        %v981 = vmul.f32 %v938, %v973
        %v982 = vmul.f32 %v939, %v969
        %v983 = vmul.f32 %v940, %v973
        %v984 = vmul.f32 %v941, %v969
        %v985 = vmul.f32 %v942, %v973
        %v986 = vmul.f32 %v943, %v969
        %v987 = vmul.f32 %v944, %v973
        %v988 = vmul.f32 %v945, %v969
        %v989 = vmul.f32 %v946, %v973
        %v990 = vmul.f32 %v947, %v969
        %v991 = vmul.f32 %v948, %v973
        %v992 = vmul.f32 %v949, %v969
        %v993 = vmul.f32 %v950, %v973
        %v994 = vmul.f32 %v951, %v969
        %v995 = vmul.f32 %v952, %v973
        %v996 = vmul.f32 %v953, %v969
        %v997 = vmul.f32 %v954, %v973
        %v998 = vmul.f32 %v955, %v969
        %v999 = vmul.f32 %v956, %v973
        %v1000 = vmul.f32 %v957, %v969
        %v1001 = vmul.f32 %v958, %v973
        %v1002 = vmul.f32 %v959, %v969
        %v1003 = vmul.f32 %v960, %v973
        %v1004 = vmul.f32 %v961, %v969
        %v1005 = vmul.f32 %v962, %v973
        %v1006 = vmul.f32 %v963, %v969
        %v1007 = vmul.f32 %v964, %v973
        %v1009 = vlaneseq
        %v1010 = vshrl.u32 %v1009, 7
        %v1011 = vsub.s32 0, %v1010
        %v1012 = vrot.slane %v707, %v1011
        %v1013 = vlaneseq
        %v1014 = vshrl.u32 %v1013, 7
        %v1015 = vsub.s32 1, %v1014
        %v1016 = vrot.slane %v707, %v1015
        %v1019 = vadd.f32 %v976, %v1012
        %v1020 = vadd.f32 %v977, %v1016
        %v1021 = vadd.f32 %v978, %v1012
        %v1022 = vadd.f32 %v979, %v1016
        %v1023 = vadd.f32 %v980, %v1012
        %v1024 = vadd.f32 %v981, %v1016
        %v1025 = vadd.f32 %v982, %v1012
        %v1026 = vadd.f32 %v983, %v1016
        %v1027 = vadd.f32 %v984, %v1012
        %v1028 = vadd.f32 %v985, %v1016
        %v1029 = vadd.f32 %v986, %v1012
        %v1030 = vadd.f32 %v987, %v1016
        %v1031 = vadd.f32 %v988, %v1012
        %v1032 = vadd.f32 %v989, %v1016
        %v1033 = vadd.f32 %v990, %v1012
        %v1034 = vadd.f32 %v991, %v1016
        %v1035 = vadd.f32 %v992, %v1012
        %v1036 = vadd.f32 %v993, %v1016
        %v1037 = vadd.f32 %v994, %v1012
        %v1038 = vadd.f32 %v995, %v1016
        %v1039 = vadd.f32 %v996, %v1012
        %v1040 = vadd.f32 %v997, %v1016
        %v1041 = vadd.f32 %v998, %v1012
        %v1042 = vadd.f32 %v999, %v1016
        %v1043 = vadd.f32 %v1000, %v1012
        %v1044 = vadd.f32 %v1001, %v1016
        %v1045 = vadd.f32 %v1002, %v1012
        %v1046 = vadd.f32 %v1003, %v1016
        %v1047 = vadd.f32 %v1004, %v1012
        %v1048 = vadd.f32 %v1005, %v1016
        %v1049 = vadd.f32 %v1006, %v1012
        %v1050 = vadd.f32 %v1007, %v1016
        %v1051 = vmax.f32 %v1019, 0.0
        %v1052 = vmax.f32 %v1020, 0.0
        %v1053 = vmax.f32 %v1021, 0.0
        %v1054 = vmax.f32 %v1022, 0.0
        %v1055 = vmax.f32 %v1023, 0.0
        %v1056 = vmax.f32 %v1024, 0.0
        %v1057 = vmax.f32 %v1025, 0.0
        %v1058 = vmax.f32 %v1026, 0.0
        %v1059 = vmax.f32 %v1027, 0.0
        %v1060 = vmax.f32 %v1028, 0.0
        %v1061 = vmax.f32 %v1029, 0.0
        %v1062 = vmax.f32 %v1030, 0.0
        %v1063 = vmax.f32 %v1031, 0.0
        %v1064 = vmax.f32 %v1032, 0.0
        %v1065 = vmax.f32 %v1033, 0.0
        %v1066 = vmax.f32 %v1034, 0.0
        %v1067 = vmax.f32 %v1035, 0.0
        %v1068 = vmax.f32 %v1036, 0.0
        %v1069 = vmax.f32 %v1037, 0.0
        %v1070 = vmax.f32 %v1038, 0.0
        %v1071 = vmax.f32 %v1039, 0.0
        %v1072 = vmax.f32 %v1040, 0.0
        %v1073 = vmax.f32 %v1041, 0.0
        %v1074 = vmax.f32 %v1042, 0.0
        %v1075 = vmax.f32 %v1043, 0.0
        %v1076 = vmax.f32 %v1044, 0.0
        %v1077 = vmax.f32 %v1045, 0.0
        %v1078 = vmax.f32 %v1046, 0.0
        %v1079 = vmax.f32 %v1047, 0.0
        %v1080 = vmax.f32 %v1048, 0.0
        %v1081 = vmax.f32 %v1049, 0.0
        %v1082 = vmax.f32 %v1050, 0.0
        %v1083 = vpack.c.bf16 %v1053, %v1051
        %v1084 = vpack.c.bf16 %v1054, %v1052
        %v1085 = vpack.c.bf16 %v1057, %v1055
        %v1086 = vpack.c.bf16 %v1058, %v1056
        %v1087 = vpack.c.bf16 %v1061, %v1059
        %v1088 = vpack.c.bf16 %v1062, %v1060
        %v1089 = vpack.c.bf16 %v1065, %v1063
        %v1090 = vpack.c.bf16 %v1066, %v1064
        %v1091 = vpack.c.bf16 %v1069, %v1067
        %v1092 = vpack.c.bf16 %v1070, %v1068
        %v1093 = vpack.c.bf16 %v1073, %v1071
        %v1094 = vpack.c.bf16 %v1074, %v1072
        %v1095 = vpack.c.bf16 %v1077, %v1075
        %v1096 = vpack.c.bf16 %v1078, %v1076
        %v1097 = vpack.c.bf16 %v1081, %v1079
        %v1098 = vpack.c.bf16 %v1082, %v1080
        %v1099 = vld [vmem:[#allocation4] sm:$0xff]
        %v1100 = vld [vmem:[#allocation4 + $0x8] sm:$0xff]
        %v1101 = vld [vmem:[#allocation4 + $0x10] sm:$0xff]
        %v1102 = vld [vmem:[#allocation4 + $0x18] sm:$0xff]
        %v1103 = vld [vmem:[#allocation4 + $0x20] sm:$0xff]
        %v1104 = vld [vmem:[#allocation4 + $0x28] sm:$0xff]
        %v1105 = vld [vmem:[#allocation4 + $0x30] sm:$0xff]
        %v1106 = vld [vmem:[#allocation4 + $0x38] sm:$0xff]
        %v1107 = vld [vmem:[#allocation4 + $0x40] sm:$0xff]
        %v1108 = vld [vmem:[#allocation4 + $0x48] sm:$0xff]
        %v1109 = vld [vmem:[#allocation4 + $0x50] sm:$0xff]
        %v1110 = vld [vmem:[#allocation4 + $0x58] sm:$0xff]
        %v1111 = vld [vmem:[#allocation4 + $0x60] sm:$0xff]
        %v1112 = vld [vmem:[#allocation4 + $0x68] sm:$0xff]
        %v1113 = vld [vmem:[#allocation4 + $0x70] sm:$0xff]
        %v1114 = vld [vmem:[#allocation4 + $0x78] sm:$0xff]
        %v1115 = vld [vmem:[#allocation4 + $0x80] sm:$0xff]
        %v1116 = vld [vmem:[#allocation4 + $0x88] sm:$0xff]
        %v1117 = vld [vmem:[#allocation4 + $0x90] sm:$0xff]
        %v1118 = vld [vmem:[#allocation4 + $0x98] sm:$0xff]
        %v1119 = vld [vmem:[#allocation4 + $0xa0] sm:$0xff]
        %v1120 = vld [vmem:[#allocation4 + $0xa8] sm:$0xff]
        %v1121 = vld [vmem:[#allocation4 + $0xb0] sm:$0xff]
        %v1122 = vld [vmem:[#allocation4 + $0xb8] sm:$0xff]
        %v1123 = vld [vmem:[#allocation4 + $0xc0] sm:$0xff]
        %v1124 = vld [vmem:[#allocation4 + $0xc8] sm:$0xff]
        %v1125 = vld [vmem:[#allocation4 + $0xd0] sm:$0xff]
        %v1126 = vld [vmem:[#allocation4 + $0xd8] sm:$0xff]
        %v1127 = vld [vmem:[#allocation4 + $0xe0] sm:$0xff]
        %v1128 = vld [vmem:[#allocation4 + $0xe8] sm:$0xff]
        %v1129 = vld [vmem:[#allocation4 + $0xf0] sm:$0xff]
        %v1130 = vld [vmem:[#allocation4 + $0xf8] sm:$0xff]
        %v1131 = vld [vmem:[%s6] sm:$0x3]
        %v1133 = vlaneseq
        %v1134 = vshrl.u32 %v1133, 7
        %v1135 = vsub.s32 0, %v1134
        %v1136 = vrot.slane %v1131, %v1135
        %v1137 = vlaneseq
        %v1138 = vshrl.u32 %v1137, 7
        %v1139 = vsub.s32 1, %v1138
        %v1140 = vrot.slane %v1131, %v1139
        %v1175 = vunpack.c.l.b16 %v1099
        %v1176 = vunpack.c.h.b16 %v1099
        %v1177 = vunpack.c.l.b16 %v1100
        %v1178 = vunpack.c.h.b16 %v1100
        %v1179 = vunpack.c.l.b16 %v1101
        %v1180 = vunpack.c.h.b16 %v1101
        %v1181 = vunpack.c.l.b16 %v1102
        %v1182 = vunpack.c.h.b16 %v1102
        %v1183 = vunpack.c.l.b16 %v1103
        %v1184 = vunpack.c.h.b16 %v1103
        %v1185 = vunpack.c.l.b16 %v1104
        %v1186 = vunpack.c.h.b16 %v1104
        %v1187 = vunpack.c.l.b16 %v1105
        %v1188 = vunpack.c.h.b16 %v1105
        %v1189 = vunpack.c.l.b16 %v1106
        %v1190 = vunpack.c.h.b16 %v1106
        %v1191 = vunpack.c.l.b16 %v1107
        %v1192 = vunpack.c.h.b16 %v1107
        %v1193 = vunpack.c.l.b16 %v1108
        %v1194 = vunpack.c.h.b16 %v1108
        %v1195 = vunpack.c.l.b16 %v1109
        %v1196 = vunpack.c.h.b16 %v1109
        %v1197 = vunpack.c.l.b16 %v1110
        %v1198 = vunpack.c.h.b16 %v1110
        %v1199 = vunpack.c.l.b16 %v1111
        %v1200 = vunpack.c.h.b16 %v1111
        %v1201 = vunpack.c.l.b16 %v1112
        %v1202 = vunpack.c.h.b16 %v1112
        %v1203 = vunpack.c.l.b16 %v1113
        %v1204 = vunpack.c.h.b16 %v1113
        %v1205 = vunpack.c.l.b16 %v1114
        %v1206 = vunpack.c.h.b16 %v1114
        %v1207 = vunpack.c.l.b16 %v1115
        %v1208 = vunpack.c.h.b16 %v1115
        %v1209 = vunpack.c.l.b16 %v1116
        %v1210 = vunpack.c.h.b16 %v1116
        %v1211 = vunpack.c.l.b16 %v1117
        %v1212 = vunpack.c.h.b16 %v1117
        %v1213 = vunpack.c.l.b16 %v1118
        %v1214 = vunpack.c.h.b16 %v1118
        %v1215 = vunpack.c.l.b16 %v1119
        %v1216 = vunpack.c.h.b16 %v1119
        %v1217 = vunpack.c.l.b16 %v1120
        %v1218 = vunpack.c.h.b16 %v1120
        %v1219 = vunpack.c.l.b16 %v1121
        %v1220 = vunpack.c.h.b16 %v1121
        %v1221 = vunpack.c.l.b16 %v1122
        %v1222 = vunpack.c.h.b16 %v1122
        %v1223 = vunpack.c.l.b16 %v1123
        %v1224 = vunpack.c.h.b16 %v1123
        %v1225 = vunpack.c.l.b16 %v1124
        %v1226 = vunpack.c.h.b16 %v1124
        %v1227 = vunpack.c.l.b16 %v1125
        %v1228 = vunpack.c.h.b16 %v1125
        %v1229 = vunpack.c.l.b16 %v1126
        %v1230 = vunpack.c.h.b16 %v1126
        %v1231 = vunpack.c.l.b16 %v1127
        %v1232 = vunpack.c.h.b16 %v1127
        %v1233 = vunpack.c.l.b16 %v1128
        %v1234 = vunpack.c.h.b16 %v1128
        %v1235 = vunpack.c.l.b16 %v1129
        %v1236 = vunpack.c.h.b16 %v1129
        %v1237 = vunpack.c.l.b16 %v1130
        %v1238 = vunpack.c.h.b16 %v1130
        %v1239 = vpack.c.b16 %v1177, %v1175
        %v1240 = vpack.c.b16 %v1178, %v1176
        %v1241 = vpack.c.b16 %v1181, %v1179
        %v1242 = vpack.c.b16 %v1182, %v1180
        %v1243 = vpack.c.b16 %v1185, %v1183
        %v1244 = vpack.c.b16 %v1186, %v1184
        %v1245 = vpack.c.b16 %v1189, %v1187
        %v1246 = vpack.c.b16 %v1190, %v1188
        %v1247 = vpack.c.b16 %v1193, %v1191
        %v1248 = vpack.c.b16 %v1194, %v1192
        %v1249 = vpack.c.b16 %v1197, %v1195
        %v1250 = vpack.c.b16 %v1198, %v1196
        %v1251 = vpack.c.b16 %v1201, %v1199
        %v1252 = vpack.c.b16 %v1202, %v1200
        %v1253 = vpack.c.b16 %v1205, %v1203
        %v1254 = vpack.c.b16 %v1206, %v1204
        %v1255 = vpack.c.b16 %v1209, %v1207
        %v1256 = vpack.c.b16 %v1210, %v1208
        %v1257 = vpack.c.b16 %v1213, %v1211
        %v1258 = vpack.c.b16 %v1214, %v1212
        %v1259 = vpack.c.b16 %v1217, %v1215
        %v1260 = vpack.c.b16 %v1218, %v1216
        %v1261 = vpack.c.b16 %v1221, %v1219
        %v1262 = vpack.c.b16 %v1222, %v1220
        %v1263 = vpack.c.b16 %v1225, %v1223
        %v1264 = vpack.c.b16 %v1226, %v1224
        %v1265 = vpack.c.b16 %v1229, %v1227
        %v1266 = vpack.c.b16 %v1230, %v1228
        %v1267 = vpack.c.b16 %v1233, %v1231
        %v1268 = vpack.c.b16 %v1234, %v1232
        %v1269 = vpack.c.b16 %v1237, %v1235
        %v1270 = vpack.c.b16 %v1238, %v1236
        %1303 = vmatprep.subr.bf16.mxu0 %v1254
        %1304 = vmatpush1.bf16.msra.mxu0 %v1253
        %1305 = vmatprep.subr.bf16.mxu0 %v1252
        %1306 = vmatpush1.bf16.msra.mxu0 %v1251
        %1307 = vmatprep.subr.bf16.mxu0 %v1250
        %1308 = vmatpush1.bf16.msra.mxu0 %v1249
        %1309 = vmatprep.subr.bf16.mxu0 %v1248
        %1310 = vmatpush1.bf16.msra.mxu0 %v1247
        %1311 = vmatprep.subr.bf16.mxu0 %v1246
        %1312 = vmatpush1.bf16.msra.mxu0 %v1245
        %1313 = vmatprep.subr.bf16.mxu0 %v1244
        %1314 = vmatpush1.bf16.msra.mxu0 %v1243
        %1315 = vmatprep.subr.bf16.mxu0 %v1242
        %1316 = vmatpush1.bf16.msra.mxu0 %v1241
        %1317 = vmatprep.subr.bf16.mxu0 %v1240
        %1318 = vmatpush1.bf16.msra.mxu0 %v1239
        %1319 = vmatprep.subr.bf16.mxu0 %v1270
        %1320 = vmatpush2.bf16.msra.mxu0 %v1269
        %1321 = vmatprep.subr.bf16.mxu0 %v1268
        %1322 = vmatpush2.bf16.msra.mxu0 %v1267
        %1323 = vmatprep.subr.bf16.mxu0 %v1266
        %1324 = vmatpush2.bf16.msra.mxu0 %v1265
        %1325 = vmatprep.subr.bf16.mxu0 %v1264
        %1326 = vmatpush2.bf16.msra.mxu0 %v1263
        %1327 = vmatprep.subr.bf16.mxu0 %v1262
        %1328 = vmatpush2.bf16.msra.mxu0 %v1261
        %1329 = vmatprep.subr.bf16.mxu0 %v1260
        %1330 = vmatpush2.bf16.msra.mxu0 %v1259
        %1331 = vmatprep.subr.bf16.mxu0 %v1258
        %1332 = vmatpush2.bf16.msra.mxu0 %v1257
        %1333 = vmatprep.subr.bf16.mxu0 %v1256
        %1334 = vmatpush2.bf16.msra.mxu0 %v1255
        %1335 = vmatprep.mubr.bf16.mxu0 %v1084
        %1336 = vmatmul.mubr.bf16.gmra.mxu0 %v1083
        %v1337 = vpop.f32.mrf.mxu0
        %v1338 = vadd.f32 %v1136, %v1337
        %v1339 = vpop.f32.mrf.mxu0
        %v1340 = vadd.f32 %v1140, %v1339
        %v1341 = vpop.f32.mrf.mxu0
        %v1342 = vadd.f32 %v1136, %v1341
        %v1343 = vpop.f32.mrf.mxu0
        %v1344 = vadd.f32 %v1140, %v1343
        %1345 = vmatprep.mubr.bf16.mxu0 %v1086
        %1346 = vmatmul.mubr.bf16.gmra.mxu0 %v1085
        %v1347 = vpop.f32.mrf.mxu0
        %v1348 = vadd.f32 %v1136, %v1347
        %v1349 = vpop.f32.mrf.mxu0
        %v1350 = vadd.f32 %v1140, %v1349
        %v1351 = vpop.f32.mrf.mxu0
        %v1352 = vadd.f32 %v1136, %v1351
        %v1353 = vpop.f32.mrf.mxu0
        %v1354 = vadd.f32 %v1140, %v1353
        %1355 = vmatprep.mubr.bf16.mxu0 %v1088
        %1356 = vmatmul.mubr.bf16.gmra.mxu0 %v1087
        %v1357 = vpop.f32.mrf.mxu0
        %v1358 = vadd.f32 %v1136, %v1357
        %v1359 = vpop.f32.mrf.mxu0
        %v1360 = vadd.f32 %v1140, %v1359
        %v1361 = vpop.f32.mrf.mxu0
        %v1362 = vadd.f32 %v1136, %v1361
        %v1363 = vpop.f32.mrf.mxu0
        %v1364 = vadd.f32 %v1140, %v1363
        %1365 = vmatprep.mubr.bf16.mxu0 %v1090
        %1366 = vmatmul.mubr.bf16.gmra.mxu0 %v1089
        %v1367 = vpop.f32.mrf.mxu0
        %v1368 = vadd.f32 %v1136, %v1367
        %v1369 = vpop.f32.mrf.mxu0
        %v1370 = vadd.f32 %v1140, %v1369
        %v1371 = vpop.f32.mrf.mxu0
        %v1372 = vadd.f32 %v1136, %v1371
        %v1373 = vpop.f32.mrf.mxu0
        %v1374 = vadd.f32 %v1140, %v1373
        %1375 = vmatprep.mubr.bf16.mxu0 %v1092
        %1376 = vmatmul.mubr.bf16.gmra.mxu0 %v1091
        %v1377 = vpop.f32.mrf.mxu0
        %v1378 = vadd.f32 %v1136, %v1377
        %v1379 = vpop.f32.mrf.mxu0
        %v1380 = vadd.f32 %v1140, %v1379
        %v1381 = vpop.f32.mrf.mxu0
        %v1382 = vadd.f32 %v1136, %v1381
        %v1383 = vpop.f32.mrf.mxu0
        %v1384 = vadd.f32 %v1140, %v1383
        %1385 = vmatprep.mubr.bf16.mxu0 %v1094
        %1386 = vmatmul.mubr.bf16.gmra.mxu0 %v1093
        %v1387 = vpop.f32.mrf.mxu0
        %v1388 = vadd.f32 %v1136, %v1387
        %v1389 = vpop.f32.mrf.mxu0
        %v1390 = vadd.f32 %v1140, %v1389
        %v1391 = vpop.f32.mrf.mxu0
        %v1392 = vadd.f32 %v1136, %v1391
        %v1393 = vpop.f32.mrf.mxu0
        %v1394 = vadd.f32 %v1140, %v1393
        %1395 = vmatprep.mubr.bf16.mxu0 %v1096
        %1396 = vmatmul.mubr.bf16.gmra.mxu0 %v1095
        %v1397 = vpop.f32.mrf.mxu0
        %v1398 = vadd.f32 %v1136, %v1397
        %v1399 = vpop.f32.mrf.mxu0
        %v1400 = vadd.f32 %v1140, %v1399
        %v1401 = vpop.f32.mrf.mxu0
        %v1402 = vadd.f32 %v1136, %v1401
        %v1403 = vpop.f32.mrf.mxu0
        %v1404 = vadd.f32 %v1140, %v1403
        %1405 = vmatprep.mubr.bf16.mxu0 %v1098
        %1406 = vmatmul.mubr.bf16.gmra.mxu0 %v1097
        %v1407 = vpop.f32.mrf.mxu0
        %v1408 = vadd.f32 %v1136, %v1407
        %v1409 = vpop.f32.mrf.mxu0
        %v1410 = vadd.f32 %v1140, %v1409
        %v1411 = vpop.f32.mrf.mxu0
        %v1412 = vadd.f32 %v1136, %v1411
        %v1413 = vpop.f32.mrf.mxu0
        %v1414 = vadd.f32 %v1140, %v1413
        %1415 = vdwg.mxu0
        %v1416 = vld [vmem:[%s7] sm:$0x3]
        %v1417 = vld [vmem:[%s8] sm:$0x3]
        %v1418 = vadd.f32 %v1338, %v1340
        %1419 = vadd.xlane.f32.xlu0 %v1418
        %v1420 = vpop.xlane.xlu0 %1419
        %v1421 = vadd.f32 %v1342, %v1344
        %1422 = vadd.xlane.f32.xlu0 %v1421
        %v1423 = vpop.xlane.xlu0 %1422
        %v1424 = vadd.f32 %v1348, %v1350
        %1425 = vadd.xlane.f32.xlu0 %v1424
        %v1426 = vpop.xlane.xlu0 %1425
        %v1427 = vadd.f32 %v1352, %v1354
        %1428 = vadd.xlane.f32.xlu0 %v1427
        %v1429 = vpop.xlane.xlu0 %1428
        %v1430 = vadd.f32 %v1358, %v1360
        %1431 = vadd.xlane.f32.xlu0 %v1430
        %v1432 = vpop.xlane.xlu0 %1431
        %v1433 = vadd.f32 %v1362, %v1364
        %1434 = vadd.xlane.f32.xlu0 %v1433
        %v1435 = vpop.xlane.xlu0 %1434
        %v1436 = vadd.f32 %v1368, %v1370
        %1437 = vadd.xlane.f32.xlu0 %v1436
        %v1438 = vpop.xlane.xlu0 %1437
        %v1439 = vadd.f32 %v1372, %v1374
        %1440 = vadd.xlane.f32.xlu0 %v1439
        %v1441 = vpop.xlane.xlu0 %1440
        %v1442 = vadd.f32 %v1378, %v1380
        %1443 = vadd.xlane.f32.xlu0 %v1442
        %v1444 = vpop.xlane.xlu0 %1443
        %v1445 = vadd.f32 %v1382, %v1384
        %1446 = vadd.xlane.f32.xlu0 %v1445
        %v1447 = vpop.xlane.xlu0 %1446
        %v1448 = vadd.f32 %v1388, %v1390
        %1449 = vadd.xlane.f32.xlu0 %v1448
        %v1450 = vpop.xlane.xlu0 %1449
        %v1451 = vadd.f32 %v1392, %v1394
        %1452 = vadd.xlane.f32.xlu0 %v1451
        %v1453 = vpop.xlane.xlu0 %1452
        %v1454 = vadd.f32 %v1398, %v1400
        %1455 = vadd.xlane.f32.xlu0 %v1454
        %v1456 = vpop.xlane.xlu0 %1455
        %v1457 = vadd.f32 %v1402, %v1404
        %1458 = vadd.xlane.f32.xlu0 %v1457
        %v1459 = vpop.xlane.xlu0 %1458
        %v1460 = vadd.f32 %v1408, %v1410
        %1461 = vadd.xlane.f32.xlu0 %v1460
        %v1462 = vpop.xlane.xlu0 %1461
        %v1463 = vadd.f32 %v1412, %v1414
        %1464 = vadd.xlane.f32.xlu0 %v1463
        %v1465 = vpop.xlane.xlu0 %1464
        %v1466 = vmul.f32 %v1420, %v756
        %v1467 = vmul.f32 %v1423, %v756
        %v1468 = vmul.f32 %v1426, %v756
        %v1469 = vmul.f32 %v1429, %v756
        %v1470 = vmul.f32 %v1432, %v756
        %v1471 = vmul.f32 %v1435, %v756
        %v1472 = vmul.f32 %v1438, %v756
        %v1473 = vmul.f32 %v1441, %v756
        %v1474 = vmul.f32 %v1444, %v756
        %v1475 = vmul.f32 %v1447, %v756
        %v1476 = vmul.f32 %v1450, %v756
        %v1477 = vmul.f32 %v1453, %v756
        %v1478 = vmul.f32 %v1456, %v756
        %v1479 = vmul.f32 %v1459, %v756
        %v1480 = vmul.f32 %v1462, %v756
        %v1481 = vmul.f32 %v1465, %v756
        %v1482 = vsub.f32 %v1338, %v1466
        %v1483 = vsub.f32 %v1340, %v1466
        %v1484 = vsub.f32 %v1342, %v1467
        %v1485 = vsub.f32 %v1344, %v1467
        %v1486 = vsub.f32 %v1348, %v1468
        %v1487 = vsub.f32 %v1350, %v1468
        %v1488 = vsub.f32 %v1352, %v1469
        %v1489 = vsub.f32 %v1354, %v1469
        %v1490 = vsub.f32 %v1358, %v1470
        %v1491 = vsub.f32 %v1360, %v1470
        %v1492 = vsub.f32 %v1362, %v1471
        %v1493 = vsub.f32 %v1364, %v1471
        %v1494 = vsub.f32 %v1368, %v1472
        %v1495 = vsub.f32 %v1370, %v1472
        %v1496 = vsub.f32 %v1372, %v1473
        %v1497 = vsub.f32 %v1374, %v1473
        %v1498 = vsub.f32 %v1378, %v1474
        %v1499 = vsub.f32 %v1380, %v1474
        %v1500 = vsub.f32 %v1382, %v1475
        %v1501 = vsub.f32 %v1384, %v1475
        %v1502 = vsub.f32 %v1388, %v1476
        %v1503 = vsub.f32 %v1390, %v1476
        %v1504 = vsub.f32 %v1392, %v1477
        %v1505 = vsub.f32 %v1394, %v1477
        %v1506 = vsub.f32 %v1398, %v1478
        %v1507 = vsub.f32 %v1400, %v1478
        %v1508 = vsub.f32 %v1402, %v1479
        %v1509 = vsub.f32 %v1404, %v1479
        %v1510 = vsub.f32 %v1408, %v1480
        %v1511 = vsub.f32 %v1410, %v1480
        %v1512 = vsub.f32 %v1412, %v1481
        %v1513 = vsub.f32 %v1414, %v1481
        %v1514 = vmul.f32 %v1482, %v1482
        %v1515 = vmul.f32 %v1483, %v1483
        %v1516 = vmul.f32 %v1484, %v1484
        %v1517 = vmul.f32 %v1485, %v1485
        %v1518 = vmul.f32 %v1486, %v1486
        %v1519 = vmul.f32 %v1487, %v1487
        %v1520 = vmul.f32 %v1488, %v1488
        %v1521 = vmul.f32 %v1489, %v1489
        %v1522 = vmul.f32 %v1490, %v1490
        %v1523 = vmul.f32 %v1491, %v1491
        %v1524 = vmul.f32 %v1492, %v1492
        %v1525 = vmul.f32 %v1493, %v1493
        %v1526 = vmul.f32 %v1494, %v1494
        %v1527 = vmul.f32 %v1495, %v1495
        %v1528 = vmul.f32 %v1496, %v1496
        %v1529 = vmul.f32 %v1497, %v1497
        %v1530 = vmul.f32 %v1498, %v1498
        %v1531 = vmul.f32 %v1499, %v1499
        %v1532 = vmul.f32 %v1500, %v1500
        %v1533 = vmul.f32 %v1501, %v1501
        %v1534 = vmul.f32 %v1502, %v1502
        %v1535 = vmul.f32 %v1503, %v1503
        %v1536 = vmul.f32 %v1504, %v1504
        %v1537 = vmul.f32 %v1505, %v1505
        %v1538 = vmul.f32 %v1506, %v1506
        %v1539 = vmul.f32 %v1507, %v1507
        %v1540 = vmul.f32 %v1508, %v1508
        %v1541 = vmul.f32 %v1509, %v1509
        %v1542 = vmul.f32 %v1510, %v1510
        %v1543 = vmul.f32 %v1511, %v1511
        %v1544 = vmul.f32 %v1512, %v1512
        %v1545 = vmul.f32 %v1513, %v1513
        %v1546 = vadd.f32 %v1514, %v1515
        %1547 = vadd.xlane.f32.xlu0 %v1546
        %v1548 = vpop.xlane.xlu0 %1547
        %v1549 = vadd.f32 %v1516, %v1517
        %1550 = vadd.xlane.f32.xlu0 %v1549
        %v1551 = vpop.xlane.xlu0 %1550
        %v1552 = vadd.f32 %v1518, %v1519
        %1553 = vadd.xlane.f32.xlu0 %v1552
        %v1554 = vpop.xlane.xlu0 %1553
        %v1555 = vadd.f32 %v1520, %v1521
        %1556 = vadd.xlane.f32.xlu0 %v1555
        %v1557 = vpop.xlane.xlu0 %1556
        %v1558 = vadd.f32 %v1522, %v1523
        %1559 = vadd.xlane.f32.xlu0 %v1558
        %v1560 = vpop.xlane.xlu0 %1559
        %v1561 = vadd.f32 %v1524, %v1525
        %1562 = vadd.xlane.f32.xlu0 %v1561
        %v1563 = vpop.xlane.xlu0 %1562
        %v1564 = vadd.f32 %v1526, %v1527
        %1565 = vadd.xlane.f32.xlu0 %v1564
        %v1566 = vpop.xlane.xlu0 %1565
        %v1567 = vadd.f32 %v1528, %v1529
        %1568 = vadd.xlane.f32.xlu0 %v1567
        %v1569 = vpop.xlane.xlu0 %1568
        %v1570 = vadd.f32 %v1530, %v1531
        %1571 = vadd.xlane.f32.xlu0 %v1570
        %v1572 = vpop.xlane.xlu0 %1571
        %v1573 = vadd.f32 %v1532, %v1533
        %1574 = vadd.xlane.f32.xlu0 %v1573
        %v1575 = vpop.xlane.xlu0 %1574
        %v1576 = vadd.f32 %v1534, %v1535
        %1577 = vadd.xlane.f32.xlu0 %v1576
        %v1578 = vpop.xlane.xlu0 %1577
        %v1579 = vadd.f32 %v1536, %v1537
        %1580 = vadd.xlane.f32.xlu0 %v1579
        %v1581 = vpop.xlane.xlu0 %1580
        %v1582 = vadd.f32 %v1538, %v1539
        %1583 = vadd.xlane.f32.xlu0 %v1582
        %v1584 = vpop.xlane.xlu0 %1583
        %v1585 = vadd.f32 %v1540, %v1541
        %1586 = vadd.xlane.f32.xlu0 %v1585
        %v1587 = vpop.xlane.xlu0 %1586
        %v1588 = vadd.f32 %v1542, %v1543
        %1589 = vadd.xlane.f32.xlu0 %v1588
        %v1590 = vpop.xlane.xlu0 %1589
        %v1591 = vadd.f32 %v1544, %v1545
        %1592 = vadd.xlane.f32.xlu0 %v1591
        %v1593 = vpop.xlane.xlu0 %1592
        %v1594 = vmul.f32 %v1548, %v756
        %v1595 = vmul.f32 %v1551, %v756
        %v1596 = vmul.f32 %v1554, %v756
        %v1597 = vmul.f32 %v1557, %v756
        %v1598 = vmul.f32 %v1560, %v756
        %v1599 = vmul.f32 %v1563, %v756
        %v1600 = vmul.f32 %v1566, %v756
        %v1601 = vmul.f32 %v1569, %v756
        %v1602 = vmul.f32 %v1572, %v756
        %v1603 = vmul.f32 %v1575, %v756
        %v1604 = vmul.f32 %v1578, %v756
        %v1605 = vmul.f32 %v1581, %v756
        %v1606 = vmul.f32 %v1584, %v756
        %v1607 = vmul.f32 %v1587, %v756
        %v1608 = vmul.f32 %v1590, %v756
        %v1609 = vmul.f32 %v1593, %v756
        %v1610 = vadd.f32 %v1594, 1e-05
        %v1611 = vadd.f32 %v1595, 1e-05
        %v1612 = vadd.f32 %v1596, 1e-05
        %v1613 = vadd.f32 %v1597, 1e-05
        %v1614 = vadd.f32 %v1598, 1e-05
        %v1615 = vadd.f32 %v1599, 1e-05
        %v1616 = vadd.f32 %v1600, 1e-05
        %v1617 = vadd.f32 %v1601, 1e-05
        %v1618 = vadd.f32 %v1602, 1e-05
        %v1619 = vadd.f32 %v1603, 1e-05
        %v1620 = vadd.f32 %v1604, 1e-05
        %v1621 = vadd.f32 %v1605, 1e-05
        %v1622 = vadd.f32 %v1606, 1e-05
        %v1623 = vadd.f32 %v1607, 1e-05
        %v1624 = vadd.f32 %v1608, 1e-05
        %v1625 = vadd.f32 %v1609, 1e-05
        %v1626 = vrsqrt.pop %v1610
        %v1627 = vrsqrt.pop %v1611
        %v1628 = vrsqrt.pop %v1612
        %v1629 = vrsqrt.pop %v1613
        %v1630 = vrsqrt.pop %v1614
        %v1631 = vrsqrt.pop %v1615
        %v1632 = vrsqrt.pop %v1616
        %v1633 = vrsqrt.pop %v1617
        %v1634 = vrsqrt.pop %v1618
        %v1635 = vrsqrt.pop %v1619
        %v1636 = vrsqrt.pop %v1620
        %v1637 = vrsqrt.pop %v1621
        %v1638 = vrsqrt.pop %v1622
        %v1639 = vrsqrt.pop %v1623
        %v1640 = vrsqrt.pop %v1624
        %v1641 = vrsqrt.pop %v1625
        %v1642 = vmul.f32 %v1482, %v1626
        %v1643 = vmul.f32 %v1483, %v1626
        %v1644 = vmul.f32 %v1484, %v1627
        %v1645 = vmul.f32 %v1485, %v1627
        %v1646 = vmul.f32 %v1486, %v1628
        %v1647 = vmul.f32 %v1487, %v1628
        %v1648 = vmul.f32 %v1488, %v1629
        %v1649 = vmul.f32 %v1489, %v1629
        %v1650 = vmul.f32 %v1490, %v1630
        %v1651 = vmul.f32 %v1491, %v1630
        %v1652 = vmul.f32 %v1492, %v1631
        %v1653 = vmul.f32 %v1493, %v1631
        %v1654 = vmul.f32 %v1494, %v1632
        %v1655 = vmul.f32 %v1495, %v1632
        %v1656 = vmul.f32 %v1496, %v1633
        %v1657 = vmul.f32 %v1497, %v1633
        %v1658 = vmul.f32 %v1498, %v1634
        %v1659 = vmul.f32 %v1499, %v1634
        %v1660 = vmul.f32 %v1500, %v1635
        %v1661 = vmul.f32 %v1501, %v1635
        %v1662 = vmul.f32 %v1502, %v1636
        %v1663 = vmul.f32 %v1503, %v1636
        %v1664 = vmul.f32 %v1504, %v1637
        %v1665 = vmul.f32 %v1505, %v1637
        %v1666 = vmul.f32 %v1506, %v1638
        %v1667 = vmul.f32 %v1507, %v1638
        %v1668 = vmul.f32 %v1508, %v1639
        %v1669 = vmul.f32 %v1509, %v1639
        %v1670 = vmul.f32 %v1510, %v1640
        %v1671 = vmul.f32 %v1511, %v1640
        %v1672 = vmul.f32 %v1512, %v1641
        %v1673 = vmul.f32 %v1513, %v1641
        %v1675 = vlaneseq
        %v1676 = vshrl.u32 %v1675, 7
        %v1677 = vsub.s32 0, %v1676
        %v1678 = vrot.slane %v1416, %v1677
        %v1679 = vlaneseq
        %v1680 = vshrl.u32 %v1679, 7
        %v1681 = vsub.s32 1, %v1680
        %v1682 = vrot.slane %v1416, %v1681
        %v1685 = vmul.f32 %v1642, %v1678
        %v1686 = vmul.f32 %v1643, %v1682
        %v1687 = vmul.f32 %v1644, %v1678
        %v1688 = vmul.f32 %v1645, %v1682
        %v1689 = vmul.f32 %v1646, %v1678
        %v1690 = vmul.f32 %v1647, %v1682
        %v1691 = vmul.f32 %v1648, %v1678
        %v1692 = vmul.f32 %v1649, %v1682
        %v1693 = vmul.f32 %v1650, %v1678
        %v1694 = vmul.f32 %v1651, %v1682
        %v1695 = vmul.f32 %v1652, %v1678
        %v1696 = vmul.f32 %v1653, %v1682
        %v1697 = vmul.f32 %v1654, %v1678
        %v1698 = vmul.f32 %v1655, %v1682
        %v1699 = vmul.f32 %v1656, %v1678
        %v1700 = vmul.f32 %v1657, %v1682
        %v1701 = vmul.f32 %v1658, %v1678
        %v1702 = vmul.f32 %v1659, %v1682
        %v1703 = vmul.f32 %v1660, %v1678
        %v1704 = vmul.f32 %v1661, %v1682
        %v1705 = vmul.f32 %v1662, %v1678
        %v1706 = vmul.f32 %v1663, %v1682
        %v1707 = vmul.f32 %v1664, %v1678
        %v1708 = vmul.f32 %v1665, %v1682
        %v1709 = vmul.f32 %v1666, %v1678
        %v1710 = vmul.f32 %v1667, %v1682
        %v1711 = vmul.f32 %v1668, %v1678
        %v1712 = vmul.f32 %v1669, %v1682
        %v1713 = vmul.f32 %v1670, %v1678
        %v1714 = vmul.f32 %v1671, %v1682
        %v1715 = vmul.f32 %v1672, %v1678
        %v1716 = vmul.f32 %v1673, %v1682
        %v1718 = vlaneseq
        %v1719 = vshrl.u32 %v1718, 7
        %v1720 = vsub.s32 0, %v1719
        %v1721 = vrot.slane %v1417, %v1720
        %v1722 = vlaneseq
        %v1723 = vshrl.u32 %v1722, 7
        %v1724 = vsub.s32 1, %v1723
        %v1725 = vrot.slane %v1417, %v1724
        %v1728 = vadd.f32 %v1685, %v1721
        %v1729 = vadd.f32 %v1686, %v1725
        %v1730 = vadd.f32 %v1687, %v1721
        %v1731 = vadd.f32 %v1688, %v1725
        %v1732 = vadd.f32 %v1689, %v1721
        %v1733 = vadd.f32 %v1690, %v1725
        %v1734 = vadd.f32 %v1691, %v1721
        %v1735 = vadd.f32 %v1692, %v1725
        %v1736 = vadd.f32 %v1693, %v1721
        %v1737 = vadd.f32 %v1694, %v1725
        %v1738 = vadd.f32 %v1695, %v1721
        %v1739 = vadd.f32 %v1696, %v1725
        %v1740 = vadd.f32 %v1697, %v1721
        %v1741 = vadd.f32 %v1698, %v1725
        %v1742 = vadd.f32 %v1699, %v1721
        %v1743 = vadd.f32 %v1700, %v1725
        %v1744 = vadd.f32 %v1701, %v1721
        %v1745 = vadd.f32 %v1702, %v1725
        %v1746 = vadd.f32 %v1703, %v1721
        %v1747 = vadd.f32 %v1704, %v1725
        %v1748 = vadd.f32 %v1705, %v1721
        %v1749 = vadd.f32 %v1706, %v1725
        %v1750 = vadd.f32 %v1707, %v1721
        %v1751 = vadd.f32 %v1708, %v1725
        %v1752 = vadd.f32 %v1709, %v1721
        %v1753 = vadd.f32 %v1710, %v1725
        %v1754 = vadd.f32 %v1711, %v1721
        %v1755 = vadd.f32 %v1712, %v1725
        %v1756 = vadd.f32 %v1713, %v1721
        %v1757 = vadd.f32 %v1714, %v1725
        %v1758 = vadd.f32 %v1715, %v1721
        %v1759 = vadd.f32 %v1716, %v1725
        %v1760 = vmax.f32 %v1728, 0.0
        %v1761 = vmax.f32 %v1729, 0.0
        %v1762 = vmax.f32 %v1730, 0.0
        %v1763 = vmax.f32 %v1731, 0.0
        %v1764 = vmax.f32 %v1732, 0.0
        %v1765 = vmax.f32 %v1733, 0.0
        %v1766 = vmax.f32 %v1734, 0.0
        %v1767 = vmax.f32 %v1735, 0.0
        %v1768 = vmax.f32 %v1736, 0.0
        %v1769 = vmax.f32 %v1737, 0.0
        %v1770 = vmax.f32 %v1738, 0.0
        %v1771 = vmax.f32 %v1739, 0.0
        %v1772 = vmax.f32 %v1740, 0.0
        %v1773 = vmax.f32 %v1741, 0.0
        %v1774 = vmax.f32 %v1742, 0.0
        %v1775 = vmax.f32 %v1743, 0.0
        %v1776 = vmax.f32 %v1744, 0.0
        %v1777 = vmax.f32 %v1745, 0.0
        %v1778 = vmax.f32 %v1746, 0.0
        %v1779 = vmax.f32 %v1747, 0.0
        %v1780 = vmax.f32 %v1748, 0.0
        %v1781 = vmax.f32 %v1749, 0.0
        %v1782 = vmax.f32 %v1750, 0.0
        %v1783 = vmax.f32 %v1751, 0.0
        %v1784 = vmax.f32 %v1752, 0.0
        %v1785 = vmax.f32 %v1753, 0.0
        %v1786 = vmax.f32 %v1754, 0.0
        %v1787 = vmax.f32 %v1755, 0.0
        %v1788 = vmax.f32 %v1756, 0.0
        %v1789 = vmax.f32 %v1757, 0.0
        %v1790 = vmax.f32 %v1758, 0.0
        %v1791 = vmax.f32 %v1759, 0.0
        %v1792 = vpack.c.bf16 %v1762, %v1760
        %v1793 = vpack.c.bf16 %v1763, %v1761
        %v1794 = vpack.c.bf16 %v1766, %v1764
        %v1795 = vpack.c.bf16 %v1767, %v1765
        %v1796 = vpack.c.bf16 %v1770, %v1768
        %v1797 = vpack.c.bf16 %v1771, %v1769
        %v1798 = vpack.c.bf16 %v1774, %v1772
        %v1799 = vpack.c.bf16 %v1775, %v1773
        %v1800 = vpack.c.bf16 %v1778, %v1776
        %v1801 = vpack.c.bf16 %v1779, %v1777
        %v1802 = vpack.c.bf16 %v1782, %v1780
        %v1803 = vpack.c.bf16 %v1783, %v1781
        %v1804 = vpack.c.bf16 %v1786, %v1784
        %v1805 = vpack.c.bf16 %v1787, %v1785
        %v1806 = vpack.c.bf16 %v1790, %v1788
        %v1807 = vpack.c.bf16 %v1791, %v1789
        %v1808 = vld [vmem:[%s9] sm:$0xf]
        %v1809 = vld [vmem:[%s9 + $0x4] sm:$0xf]
        %v1810 = vld [vmem:[%s9 + $0x8] sm:$0xf]
        %v1811 = vld [vmem:[%s9 + $0xc] sm:$0xf]
        %v1812 = vld [vmem:[%s9 + $0x10] sm:$0xf]
        %v1813 = vld [vmem:[%s9 + $0x14] sm:$0xf]
        %v1814 = vld [vmem:[%s9 + $0x18] sm:$0xf]
        %v1815 = vld [vmem:[%s9 + $0x1c] sm:$0xf]
        %v1816 = vld [vmem:[%s9 + $0x20] sm:$0xf]
        %v1817 = vld [vmem:[%s9 + $0x24] sm:$0xf]
        %v1818 = vld [vmem:[%s9 + $0x28] sm:$0xf]
        %v1819 = vld [vmem:[%s9 + $0x2c] sm:$0xf]
        %v1820 = vld [vmem:[%s9 + $0x30] sm:$0xf]
        %v1821 = vld [vmem:[%s9 + $0x34] sm:$0xf]
        %v1822 = vld [vmem:[%s9 + $0x38] sm:$0xf]
        %v1823 = vld [vmem:[%s9 + $0x3c] sm:$0xf]
        %v1824 = vld [vmem:[%s9 + $0x40] sm:$0xf]
        %v1825 = vld [vmem:[%s9 + $0x44] sm:$0xf]
        %v1826 = vld [vmem:[%s9 + $0x48] sm:$0xf]
        %v1827 = vld [vmem:[%s9 + $0x4c] sm:$0xf]
        %v1828 = vld [vmem:[%s9 + $0x50] sm:$0xf]
        %v1829 = vld [vmem:[%s9 + $0x54] sm:$0xf]
        %v1830 = vld [vmem:[%s9 + $0x58] sm:$0xf]
        %v1831 = vld [vmem:[%s9 + $0x5c] sm:$0xf]
        %v1832 = vld [vmem:[%s9 + $0x60] sm:$0xf]
        %v1833 = vld [vmem:[%s9 + $0x64] sm:$0xf]
        %v1834 = vld [vmem:[%s9 + $0x68] sm:$0xf]
        %v1835 = vld [vmem:[%s9 + $0x6c] sm:$0xf]
        %v1836 = vld [vmem:[%s9 + $0x70] sm:$0xf]
        %v1837 = vld [vmem:[%s9 + $0x74] sm:$0xf]
        %v1838 = vld [vmem:[%s9 + $0x78] sm:$0xf]
        %v1839 = vld [vmem:[%s9 + $0x7c] sm:$0xf]
        %v1840 = vld [vmem:[%s10] sm:$0x1]
        %v1842 = vlaneseq
        %v1843 = vshrl.u32 %v1842, 7
        %v1844 = vsub.s32 0, %v1843
        %v1845 = vrot.slane %v1840, %v1844
        %v1879 = vunpack.c.l.b16 %v1808
        %v1880 = vunpack.c.l.b16 %v1809
        %v1881 = vunpack.c.l.b16 %v1810
        %v1882 = vunpack.c.l.b16 %v1811
        %v1883 = vunpack.c.l.b16 %v1812
        %v1884 = vunpack.c.l.b16 %v1813
        %v1885 = vunpack.c.l.b16 %v1814
        %v1886 = vunpack.c.l.b16 %v1815
        %v1887 = vunpack.c.l.b16 %v1816
        %v1888 = vunpack.c.l.b16 %v1817
        %v1889 = vunpack.c.l.b16 %v1818
        %v1890 = vunpack.c.l.b16 %v1819
        %v1891 = vunpack.c.l.b16 %v1820
        %v1892 = vunpack.c.l.b16 %v1821
        %v1893 = vunpack.c.l.b16 %v1822
        %v1894 = vunpack.c.l.b16 %v1823
        %v1895 = vunpack.c.l.b16 %v1824
        %v1896 = vunpack.c.l.b16 %v1825
        %v1897 = vunpack.c.l.b16 %v1826
        %v1898 = vunpack.c.l.b16 %v1827
        %v1899 = vunpack.c.l.b16 %v1828
        %v1900 = vunpack.c.l.b16 %v1829
        %v1901 = vunpack.c.l.b16 %v1830
        %v1902 = vunpack.c.l.b16 %v1831
        %v1903 = vunpack.c.l.b16 %v1832
        %v1904 = vunpack.c.l.b16 %v1833
        %v1905 = vunpack.c.l.b16 %v1834
        %v1906 = vunpack.c.l.b16 %v1835
        %v1907 = vunpack.c.l.b16 %v1836
        %v1908 = vunpack.c.l.b16 %v1837
        %v1909 = vunpack.c.l.b16 %v1838
        %v1910 = vunpack.c.l.b16 %v1839
        %v1911 = vpack.c.b16 %v1880, %v1879
        %v1912 = vpack.c.b16 %v1882, %v1881
        %v1913 = vpack.c.b16 %v1884, %v1883
        %v1914 = vpack.c.b16 %v1886, %v1885
        %v1915 = vpack.c.b16 %v1888, %v1887
        %v1916 = vpack.c.b16 %v1890, %v1889
        %v1917 = vpack.c.b16 %v1892, %v1891
        %v1918 = vpack.c.b16 %v1894, %v1893
        %v1919 = vpack.c.b16 %v1896, %v1895
        %v1920 = vpack.c.b16 %v1898, %v1897
        %v1921 = vpack.c.b16 %v1900, %v1899
        %v1922 = vpack.c.b16 %v1902, %v1901
        %v1923 = vpack.c.b16 %v1904, %v1903
        %v1924 = vpack.c.b16 %v1906, %v1905
        %v1925 = vpack.c.b16 %v1908, %v1907
        %v1926 = vpack.c.b16 %v1910, %v1909
        %1943 = vmatprep.subr.bf16.mxu0 0
        %1944 = vmatpush1.bf16.msra.mxu0 %v1918
        %1945 = vmatprep.subr.bf16.mxu0 0
        %1946 = vmatpush1.bf16.msra.mxu0 %v1917
        %1947 = vmatprep.subr.bf16.mxu0 0
        %1948 = vmatpush1.bf16.msra.mxu0 %v1916
        %1949 = vmatprep.subr.bf16.mxu0 0
        %1950 = vmatpush1.bf16.msra.mxu0 %v1915
        %1951 = vmatprep.subr.bf16.mxu0 0
        %1952 = vmatpush1.bf16.msra.mxu0 %v1914
        %1953 = vmatprep.subr.bf16.mxu0 0
        %1954 = vmatpush1.bf16.msra.mxu0 %v1913
        %1955 = vmatprep.subr.bf16.mxu0 0
        %1956 = vmatpush1.bf16.msra.mxu0 %v1912
        %1957 = vmatprep.subr.bf16.mxu0 0
        %1958 = vmatpush1.bf16.msra.mxu0 %v1911
        %1959 = vmatprep.subr.bf16.mxu0 0
        %1960 = vmatpush2.bf16.msra.mxu0 %v1926
        %1961 = vmatprep.subr.bf16.mxu0 0
        %1962 = vmatpush2.bf16.msra.mxu0 %v1925
        %1963 = vmatprep.subr.bf16.mxu0 0
        %1964 = vmatpush2.bf16.msra.mxu0 %v1924
        %1965 = vmatprep.subr.bf16.mxu0 0
        %1966 = vmatpush2.bf16.msra.mxu0 %v1923
        %1967 = vmatprep.subr.bf16.mxu0 0
        %1968 = vmatpush2.bf16.msra.mxu0 %v1922
        %1969 = vmatprep.subr.bf16.mxu0 0
        %1970 = vmatpush2.bf16.msra.mxu0 %v1921
        %1971 = vmatprep.subr.bf16.mxu0 0
        %1972 = vmatpush2.bf16.msra.mxu0 %v1920
        %1973 = vmatprep.subr.bf16.mxu0 0
        %1974 = vmatpush2.bf16.msra.mxu0 %v1919
        %1975 = vmatprep.mubr.bf16.mxu0 %v1793
        %1976 = vmatmul.mubr.bf16.gmra.mxu0 %v1792
        %v1977 = vpop.f32.mrf.mxu0
        %v1978 = vadd.f32 %v1845, %v1977
        %v1979 = vpop.f32.mrf.mxu0
        %v1980 = vpop.f32.mrf.mxu0
        %v1981 = vadd.f32 %v1845, %v1980
        %v1982 = vpop.f32.mrf.mxu0
        %1983 = vmatprep.mubr.bf16.mxu0 %v1795
        %1984 = vmatmul.mubr.bf16.gmra.mxu0 %v1794
        %v1985 = vpop.f32.mrf.mxu0
        %v1986 = vadd.f32 %v1845, %v1985
        %v1987 = vpop.f32.mrf.mxu0
        %v1988 = vpop.f32.mrf.mxu0
        %v1989 = vadd.f32 %v1845, %v1988
        %v1990 = vpop.f32.mrf.mxu0
        %1991 = vmatprep.mubr.bf16.mxu0 %v1797
        %1992 = vmatmul.mubr.bf16.gmra.mxu0 %v1796
        %v1993 = vpop.f32.mrf.mxu0
        %v1994 = vadd.f32 %v1845, %v1993
        %v1995 = vpop.f32.mrf.mxu0
        %v1996 = vpop.f32.mrf.mxu0
        %v1997 = vadd.f32 %v1845, %v1996
        %v1998 = vpop.f32.mrf.mxu0
        %1999 = vmatprep.mubr.bf16.mxu0 %v1799
        %2000 = vmatmul.mubr.bf16.gmra.mxu0 %v1798
        %v2001 = vpop.f32.mrf.mxu0
        %v2002 = vadd.f32 %v1845, %v2001
        %v2003 = vpop.f32.mrf.mxu0
        %v2004 = vpop.f32.mrf.mxu0
        %v2005 = vadd.f32 %v1845, %v2004
        %v2006 = vpop.f32.mrf.mxu0
        %2007 = vmatprep.mubr.bf16.mxu0 %v1801
        %2008 = vmatmul.mubr.bf16.gmra.mxu0 %v1800
        %v2009 = vpop.f32.mrf.mxu0
        %v2010 = vadd.f32 %v1845, %v2009
        %v2011 = vpop.f32.mrf.mxu0
        %v2012 = vpop.f32.mrf.mxu0
        %v2013 = vadd.f32 %v1845, %v2012
        %v2014 = vpop.f32.mrf.mxu0
        %2015 = vmatprep.mubr.bf16.mxu0 %v1803
        %2016 = vmatmul.mubr.bf16.gmra.mxu0 %v1802
        %v2017 = vpop.f32.mrf.mxu0
        %v2018 = vadd.f32 %v1845, %v2017
        %v2019 = vpop.f32.mrf.mxu0
        %v2020 = vpop.f32.mrf.mxu0
        %v2021 = vadd.f32 %v1845, %v2020
        %v2022 = vpop.f32.mrf.mxu0
        %2023 = vmatprep.mubr.bf16.mxu0 %v1805
        %2024 = vmatmul.mubr.bf16.gmra.mxu0 %v1804
        %v2025 = vpop.f32.mrf.mxu0
        %v2026 = vadd.f32 %v1845, %v2025
        %v2027 = vpop.f32.mrf.mxu0
        %v2028 = vpop.f32.mrf.mxu0
        %v2029 = vadd.f32 %v1845, %v2028
        %v2030 = vpop.f32.mrf.mxu0
        %2031 = vmatprep.mubr.bf16.mxu0 %v1807
        %2032 = vmatmul.mubr.bf16.gmra.mxu0 %v1806
        %v2033 = vpop.f32.mrf.mxu0
        %v2034 = vadd.f32 %v1845, %v2033
        %v2035 = vpop.f32.mrf.mxu0
        %v2036 = vpop.f32.mrf.mxu0
        %v2037 = vadd.f32 %v1845, %v2036
        %v2038 = vpop.f32.mrf.mxu0
        %2039 = vdwg.mxu0
        %v2040 = vlaneseq
        %v2041 = vand.u32 %v2040, 127
        %vm2042 = vcmp.eq.s32.totalorder %v2041, 7
        %v2043 = vxor.u32 %v1978, 2147483648
        %v2044 = vxor.u32 %v1981, 2147483648
        %v2045 = vxor.u32 %v1986, 2147483648
        %v2046 = vxor.u32 %v1989, 2147483648
        %v2047 = vxor.u32 %v1994, 2147483648
        %v2048 = vxor.u32 %v1997, 2147483648
        %v2049 = vxor.u32 %v2002, 2147483648
        %v2050 = vxor.u32 %v2005, 2147483648
        %v2051 = vxor.u32 %v2010, 2147483648
        %v2052 = vxor.u32 %v2013, 2147483648
        %v2053 = vxor.u32 %v2018, 2147483648
        %v2054 = vxor.u32 %v2021, 2147483648
        %v2055 = vxor.u32 %v2026, 2147483648
        %v2056 = vxor.u32 %v2029, 2147483648
        %v2057 = vxor.u32 %v2034, 2147483648
        %v2058 = vxor.u32 %v2037, 2147483648
        %v2059 = vmul.f32 %v2043, 1.442695
        %v2060 = vpow.pop %v2059
        %v2061 = vmul.f32 %v2044, 1.442695
        %v2062 = vpow.pop %v2061
        %v2063 = vmul.f32 %v2045, 1.442695
        %v2064 = vpow.pop %v2063
        %v2065 = vmul.f32 %v2046, 1.442695
        %v2066 = vpow.pop %v2065
        %v2067 = vmul.f32 %v2047, 1.442695
        %v2068 = vpow.pop %v2067
        %v2069 = vmul.f32 %v2048, 1.442695
        %v2070 = vpow.pop %v2069
        %v2071 = vmul.f32 %v2049, 1.442695
        %v2072 = vpow.pop %v2071
        %v2073 = vmul.f32 %v2050, 1.442695
        %v2074 = vpow.pop %v2073
        %v2075 = vmul.f32 %v2051, 1.442695
        %v2076 = vpow.pop %v2075
        %v2077 = vmul.f32 %v2052, 1.442695
        %v2078 = vpow.pop %v2077
        %v2079 = vmul.f32 %v2053, 1.442695
        %v2080 = vpow.pop %v2079
        %v2081 = vmul.f32 %v2054, 1.442695
        %v2082 = vpow.pop %v2081
        %v2083 = vmul.f32 %v2055, 1.442695
        %v2084 = vpow.pop %v2083
        %v2085 = vmul.f32 %v2056, 1.442695
        %v2086 = vpow.pop %v2085
        %v2087 = vmul.f32 %v2057, 1.442695
        %v2088 = vpow.pop %v2087
        %v2089 = vmul.f32 %v2058, 1.442695
        %v2090 = vpow.pop %v2089
        %v2091 = vadd.f32 %v2060, 1.0
        %v2092 = vadd.f32 %v2062, 1.0
        %v2093 = vadd.f32 %v2064, 1.0
        %v2094 = vadd.f32 %v2066, 1.0
        %v2095 = vadd.f32 %v2068, 1.0
        %v2096 = vadd.f32 %v2070, 1.0
        %v2097 = vadd.f32 %v2072, 1.0
        %v2098 = vadd.f32 %v2074, 1.0
        %v2099 = vadd.f32 %v2076, 1.0
        %v2100 = vadd.f32 %v2078, 1.0
        %v2101 = vadd.f32 %v2080, 1.0
        %v2102 = vadd.f32 %v2082, 1.0
        %v2103 = vadd.f32 %v2084, 1.0
        %v2104 = vadd.f32 %v2086, 1.0
        %v2105 = vadd.f32 %v2088, 1.0
        %v2106 = vadd.f32 %v2090, 1.0
        %v2107 = vrcp.pop %v2091
        %v2108 = vmul.f32 1.0, %v2107
        %v2109 = vrcp.pop %v2092
        %v2110 = vmul.f32 1.0, %v2109
        %v2111 = vrcp.pop %v2093
        %v2112 = vmul.f32 1.0, %v2111
        %v2113 = vrcp.pop %v2094
        %v2114 = vmul.f32 1.0, %v2113
        %v2115 = vrcp.pop %v2095
        %v2116 = vmul.f32 1.0, %v2115
        %v2117 = vrcp.pop %v2096
        %v2118 = vmul.f32 1.0, %v2117
        %v2119 = vrcp.pop %v2097
        %v2120 = vmul.f32 1.0, %v2119
        %v2121 = vrcp.pop %v2098
        %v2122 = vmul.f32 1.0, %v2121
        %v2123 = vrcp.pop %v2099
        %v2124 = vmul.f32 1.0, %v2123
        %v2125 = vrcp.pop %v2100
        %v2126 = vmul.f32 1.0, %v2125
        %v2127 = vrcp.pop %v2101
        %v2128 = vmul.f32 1.0, %v2127
        %v2129 = vrcp.pop %v2102
        %v2130 = vmul.f32 1.0, %v2129
        %v2131 = vrcp.pop %v2103
        %v2132 = vmul.f32 1.0, %v2131
        %v2133 = vrcp.pop %v2104
        %v2134 = vmul.f32 1.0, %v2133
        %v2135 = vrcp.pop %v2105
        %v2136 = vmul.f32 1.0, %v2135
        %v2137 = vrcp.pop %v2106
        %v2138 = vmul.f32 1.0, %v2137
        %v2139 = vsel %vm2042, %v2108, %v1978
        %v2140 = vsel %vm2042, %v2110, %v1981
        %v2141 = vsel %vm2042, %v2112, %v1986
        %v2142 = vsel %vm2042, %v2114, %v1989
        %v2143 = vsel %vm2042, %v2116, %v1994
        %v2144 = vsel %vm2042, %v2118, %v1997
        %v2145 = vsel %vm2042, %v2120, %v2002
        %v2146 = vsel %vm2042, %v2122, %v2005
        %v2147 = vsel %vm2042, %v2124, %v2010
        %v2148 = vsel %vm2042, %v2126, %v2013
        %v2149 = vsel %vm2042, %v2128, %v2018
        %v2150 = vsel %vm2042, %v2130, %v2021
        %v2151 = vsel %vm2042, %v2132, %v2026
        %v2152 = vsel %vm2042, %v2134, %v2029
        %v2153 = vsel %vm2042, %v2136, %v2034
        %v2154 = vsel %vm2042, %v2138, %v2037
        %vm2155 = vcmask 64512
        %2156 = vst.msk [vmem:[%s418] sm:$0xff] %vm2155, %v2139
        %2157 = vst.msk [vmem:[%s418 + $0x8] sm:$0xff] %vm2155, %v2140
        %2158 = vst.msk [vmem:[%s418 + $0x10] sm:$0xff] %vm2155, %v2141
        %2159 = vst.msk [vmem:[%s418 + $0x18] sm:$0xff] %vm2155, %v2142
        %2160 = vst.msk [vmem:[%s418 + $0x20] sm:$0xff] %vm2155, %v2143
        %2161 = vst.msk [vmem:[%s418 + $0x28] sm:$0xff] %vm2155, %v2144
        %2162 = vst.msk [vmem:[%s418 + $0x30] sm:$0xff] %vm2155, %v2145
        %2163 = vst.msk [vmem:[%s418 + $0x38] sm:$0xff] %vm2155, %v2146
        %2164 = vst.msk [vmem:[%s418 + $0x40] sm:$0xff] %vm2155, %v2147
        %2165 = vst.msk [vmem:[%s418 + $0x48] sm:$0xff] %vm2155, %v2148
        %2166 = vst.msk [vmem:[%s418 + $0x50] sm:$0xff] %vm2155, %v2149
        %2167 = vst.msk [vmem:[%s418 + $0x58] sm:$0xff] %vm2155, %v2150
        %2168 = vst.msk [vmem:[%s418 + $0x60] sm:$0xff] %vm2155, %v2151
        %2169 = vst.msk [vmem:[%s418 + $0x68] sm:$0xff] %vm2155, %v2152
        %2170 = vst.msk [vmem:[%s418 + $0x70] sm:$0xff] %vm2155, %v2153
        %2171 = vst.msk [vmem:[%s418 + $0x78] sm:$0xff] %vm2155, %v2154
        %s2172 = smul.u32 16, %s24
        %p2173 = scmp.lt.s32.totalorder %s2172, 31
        %s2174 = scalar_select %p2173, %s2172, 31
        %s2175 = smul.addr %s2174, 8
        %s2176 = scalar_lea.vmem %s11, %s2175
        // Predicated region
        $region73: #{tpu_custom_call.1} parent=63 // pred_check
          %p2177 = pneg %p278
        $region74: #{tpu_custom_call.1} parent=63 // pred_check_branch
          %2179 = sbr.rel (%p2177) target = $region76
        $region75: #{tpu_custom_call.1} parent=63 // pred_region
          %s2180 = smul.u32 16, %s24
        $region76: #{tpu_custom_call.1} parent=63 // pred_fallthru
          _
      $region64: #{tpu_custom_call.1} parent=5 // pred_fallthru
        _
      %p2181 = scmp.le.s32.totalorder 2, %s19
      // Predicated region
      $region77: #{tpu_custom_call.1} parent=5 // pred_check
        %p2182 = pneg %p2181
      $region78: #{tpu_custom_call.1} parent=5 // pred_check_branch
        %2184 = sbr.rel (%p2182) target = $region80
      $region79: #{tpu_custom_call.1} parent=5 // pred_region
        %s2185 = ssub.s32 %s19, 2
        // Predicated region
        $region81: #{tpu_custom_call.1} parent=79 // pred_check
          %p2186 = pneg %p284
        $region82: #{tpu_custom_call.1} parent=79 // pred_check_branch
          %2188 = sbr.rel (%p2186) target = $region84
        $region83: #{tpu_custom_call.1} parent=79 // pred_region
          %s2189 = smul.u32 16, %s25
          %p2190 = scmp.lt.s32.totalorder %s2189, 31
          %s2191 = scalar_select %p2190, %s2189, 31
          %s2192 = smul.addr %s2191, 8
          %s2193 = scalar_lea.vmem %s11, %s2192
        $region84: #{tpu_custom_call.1} parent=79 // pred_fallthru
          _
      $region80: #{tpu_custom_call.1} parent=5 // pred_fallthru
        _
    $region6: #{tpu_custom_call.1} parent=1 // loop_footer
      %s23 = sadd.s32 1, %s19
    $region7: #{tpu_custom_call.1} parent=1 // loop_footer_branch
      %18 = sbr.rel target = $region3
    $region8: #{tpu_custom_call.1} parent=1 // loop_exit
      _
    %2194 = vsyncpa [#allocation3], 1
    %s2195 = scalar_lea.sflag [#allocation3], 1
    %2196 = vsyncpa %s2195, 1
    %2197 = vsyncpa [#allocation5], 1

</llo_original>
